<compile_context>
chip_gen: v6e
topology: v6e:2x2x1
jax: 0.10.0
libtpu: 0.0.40
codegen_flags: <defaults>
</compile_context>

<pallas_src>
import functools

import jax
import jax.numpy as jnp
from jax import lax
from jax.experimental import pallas as pl
from jax.experimental.pallas import tpu as pltpu


# ---------------------------------------------------------------------------
# Fused LSTM kernel: input projection prologue + serial recurrence + output
# projection, one pallas_call.  grid = (batch_blocks [parallel],
# time_blocks [arbitrary]); h/c carries live in VMEM scratch across time
# blocks and are re-zeroed at t_block == 0 for every batch block.
# ---------------------------------------------------------------------------
def _lstm_fused_kernel(x_ref, wih_ref, whh_ref, bg_ref, wout_ref, bo_ref,
                       y_ref, h_scr, c_scr, gx_scr, *, hidden_size, block_t):
    H = hidden_size
    t_blk = pl.program_id(1)

    @pl.when(t_blk == 0)
    def _():
        h_scr[...] = jnp.zeros_like(h_scr)
        c_scr[...] = jnp.zeros_like(c_scr)

    # Weights/biases: constant index_map -> stay resident in VMEM across the
    # whole grid (no re-DMA).  Hoisted out of all loops.
    wih = wih_ref[...]           # (I, 4H)
    whh = whh_ref[...]           # (H, 4H)
    bg = bg_ref[...]             # (1, 4H)   (= b_ih + b_hh)
    wout = wout_ref[...]         # (H, O)
    bo = bo_ref[...]             # (1, O)

    # ---- prologue: input projection for every timestep of this block ----
    # No serial dependency, so these MXU pushes pipeline back-to-back before
    # the recurrence; each result goes straight to scratch (no live buildup).
    for i in range(block_t):
        gx_scr[i] = (jnp.dot(x_ref[i], wih,
                             preferred_element_type=jnp.float32) + bg)

    # ---- serial recurrence over the block_t timesteps of this block ----
    # Time-major layout: gx_scr[i] / y_ref[i] are dense (bb, 4H) / (bb, O)
    # tiles (no sublane-strided access on the critical path).  The per-step
    # y = h @ W_out push feeds nothing downstream, so it hides under the next
    # step's h @ W_hh latency.
    def step(i, carry):
        h, c = carry
        gates = gx_scr[i] + jnp.dot(h, whh, preferred_element_type=jnp.float32)
        # PyTorch gate ordering [i, f, g, o].
        i_g = jax.nn.sigmoid(gates[:, 0:H])
        f_g = jax.nn.sigmoid(gates[:, H:2 * H])
        g_g = jnp.tanh(gates[:, 2 * H:3 * H])
        o_g = jax.nn.sigmoid(gates[:, 3 * H:4 * H])
        c = f_g * c + i_g * g_g
        h = o_g * jnp.tanh(c)
        y_ref[i] = (jnp.dot(h, wout, preferred_element_type=jnp.float32)
                    + bo).astype(y_ref.dtype)
        return (h, c)

    # Full unroll for short blocks (scheduler visibility); partial unroll for
    # long blocks so gate temporaries don't all stay live at once.
    unroll = True if block_t <= 8 else 4
    h, c = lax.fori_loop(0, block_t, step, (h_scr[...], c_scr[...]),
                         unroll=unroll)
    h_scr[...] = h
    c_scr[...] = c


# ---------------------------------------------------------------------------
# VMEM budgeting helpers (stream double-buffers + resident weights + scratch).
# ---------------------------------------------------------------------------
def _vmem_bytes(block_t, bb, inp, hid, out):
    f32 = 4
    stream = 2 * block_t * bb * inp + 2 * block_t * bb * out   # x / y dbuf
    weights = 2 * (inp * 4 * hid + hid * 4 * hid + 4 * hid + hid * out + out)
    scratch = block_t * bb * 4 * hid + 2 * bb * hid
    return f32 * (stream + weights + scratch)


def _pick_block_t(T, bb, inp, hid, out, budget_bytes=40 * 1024 * 1024):
    """Largest divisor of T (<= 32) whose working set fits the VMEM budget."""
    for t in range(min(T, 32), 0, -1):
        if T % t == 0 and _vmem_bytes(t, bb, inp, hid, out) <= budget_bytes:
            return t
    return 1


def rnn_model_forward(x, params, *, block_t=None, batch_block=None):
    """x: (B, T, I) float32.  Returns (B, T, O)."""
    B, T, I = x.shape
    w_ih, w_hh, b_ih, b_hh, w_out, b_out = (
        params["w_ih"], params["w_hh"], params["b_ih"], params["b_hh"],
        params["w_out"], params["b_out"])
    H = w_hh.shape[1]
    O = w_out.shape[0]

    # ---- weight prep (glue, plain JAX) ----
    wih_t = jnp.asarray(w_ih.T, jnp.float32)                    # (I, 4H)
    whh_t = jnp.asarray(w_hh.T, jnp.float32)                    # (H, 4H)
    b_gate = jnp.asarray((b_ih + b_hh)[None, :], jnp.float32)   # (1, 4H)
    wout_t = jnp.asarray(w_out.T, jnp.float32)                  # (H, O)
    bout = jnp.asarray(b_out[None, :], jnp.float32)             # (1, O)

    # Batch block: default bb = B.  Splitting batch on 1-TC chips (v5e/v6e)
    # is pure per-grid-step overhead and shrinks the per-step MXU M dim; on
    # v7x pass batch_block=B//2 (a multiple of 8) for large B to shard the
    # "parallel" axis across its two TensorCores.
    bb = B if batch_block is None else int(batch_block)
    if bb <= 0 or B % bb != 0 or (bb != B and bb % 8 != 0):
        bb = B

    if block_t is None:
        block_t = _pick_block_t(T, bb, I, H, O)
    if T % block_t != 0:
        block_t = T                                             # avoid remainder blocks

    # Time-major streams: dense per-timestep leading-axis access in-kernel.
    x_tb = jnp.swapaxes(x.astype(jnp.float32), 0, 1)            # (T, B, I)

    vmem_limit = int(min(max(_vmem_bytes(block_t, bb, I, H, O) + (4 << 20),
                             32 << 20),
                         48 << 20))

    kernel = functools.partial(_lstm_fused_kernel,
                               hidden_size=H, block_t=block_t)
    y_tb = pl.pallas_call(
        kernel,
        out_shape=jax.ShapeDtypeStruct((T, B, O), jnp.float32),
        grid_spec=pltpu.PrefetchScalarGridSpec(
            num_scalar_prefetch=0,
            grid=(B // bb, T // block_t),
            in_specs=[
                pl.BlockSpec((block_t, bb, I), lambda b, t: (t, b, 0)),
                pl.BlockSpec((I, 4 * H), lambda b, t: (0, 0)),
                pl.BlockSpec((H, 4 * H), lambda b, t: (0, 0)),
                pl.BlockSpec((1, 4 * H), lambda b, t: (0, 0)),
                pl.BlockSpec((H, O), lambda b, t: (0, 0)),
                pl.BlockSpec((1, O), lambda b, t: (0, 0)),
            ],
            out_specs=pl.BlockSpec((block_t, bb, O), lambda b, t: (t, b, 0)),
            scratch_shapes=[
                pltpu.VMEM((bb, H), jnp.float32),               # h carry
                pltpu.VMEM((bb, H), jnp.float32),               # c carry
                pltpu.VMEM((block_t, bb, 4 * H), jnp.float32),  # gates_x block
            ],
        ),
        compiler_params=pltpu.CompilerParams(
            dimension_semantics=("parallel", "arbitrary"),
            vmem_limit_bytes=vmem_limit),
    )(x_tb, wih_t, whh_t, b_gate, wout_t, bout)

    return jnp.swapaxes(y_tb, 0, 1)                             # (B, T, O)


def rnn_model_reference(x, params):
    """Pure-JAX reference (mirrors torch.nn.LSTM(batch_first=True) + nn.Linear)."""
    w_ih, w_hh, b_ih, b_hh, w_out, b_out = (
        params["w_ih"], params["w_hh"], params["b_ih"], params["b_hh"],
        params["w_out"], params["b_out"])
    H = w_hh.shape[1]
    B = x.shape[0]

    def step(carry, x_t):
        h, c = carry
        gates = x_t @ w_ih.T + b_ih + h @ w_hh.T + b_hh
        i = jax.nn.sigmoid(gates[:, 0:H])
        f = jax.nn.sigmoid(gates[:, H:2 * H])
        g = jnp.tanh(gates[:, 2 * H:3 * H])
        o = jax.nn.sigmoid(gates[:, 3 * H:4 * H])
        c = f * c + i * g
        h = o * jnp.tanh(c)
        return (h, c), h

    h0 = jnp.zeros((B, H), jnp.float32)
    c0 = jnp.zeros((B, H), jnp.float32)
    _, hs = jax.lax.scan(step, (h0, c0), jnp.swapaxes(x, 0, 1))   # (T, B, H)
    hs = jnp.swapaxes(hs, 0, 1)                                    # (B, T, H)
    return hs @ w_out.T + b_out


def make_params(key, input_size, hidden_size, output_size):
    """Deterministic init (U(-1/sqrt(H), 1/sqrt(H)), like PyTorch defaults)."""
    ks = jax.random.split(key, 6)
    bound = 1.0 / jnp.sqrt(hidden_size)

    def u(k, shape):
        return jax.random.uniform(k, shape, jnp.float32, -bound, bound)

    return {
        "w_ih": u(ks[0], (4 * hidden_size, input_size)),
        "w_hh": u(ks[1], (4 * hidden_size, hidden_size)),
        "b_ih": u(ks[2], (4 * hidden_size,)),
        "b_hh": u(ks[3], (4 * hidden_size,)),
        "w_out": u(ks[4], (output_size, hidden_size)),
        "b_out": u(ks[5], (output_size,)),
    }


if __name__ == "__main__":
    # TODO(synk): only the default cell_type='LSTM', num_layers=1, hidden=None
    # path of RNNModel is implemented (GRU/RNN/QRNN/TCN/DRNN branches are not).
    B, T, I, H, O = 2, 8, 16, 32, 8
    key = jax.random.PRNGKey(0)
    k_x, k_p = jax.random.split(key)
    x = jax.random.normal(k_x, (B, T, I), jnp.float32)
    params = make_params(k_p, I, H, O)

    out = rnn_model_forward(x, params)
    out = jax.block_until_ready(out)

    ref = rnn_model_reference(x, params)
    assert out.shape == (B, T, O)
    assert jnp.allclose(out, ref, atol=1e-4, rtol=1e-4), (
        f"max abs err {jnp.max(jnp.abs(out - ref))}")

    print("KERNEL_OK")
</pallas_src>

<mosaic_0001>
module attributes {stable_mosaic.version = 11 : i64} {
  func.func @_lstm_fused_kernel(%arg0: i32, %arg1: i32, %arg2: memref<8x2x16xf32, #tpu.memory_space<vmem>>, %arg3: memref<16x128xf32, #tpu.memory_space<vmem>>, %arg4: memref<32x128xf32, #tpu.memory_space<vmem>>, %arg5: memref<1x128xf32, #tpu.memory_space<vmem>>, %arg6: memref<32x8xf32, #tpu.memory_space<vmem>>, %arg7: memref<1x8xf32, #tpu.memory_space<vmem>>, %arg8: memref<8x2x8xf32, #tpu.memory_space<vmem>>, %arg9: memref<2x32xf32, #tpu.memory_space<vmem>>, %arg10: memref<2x32xf32, #tpu.memory_space<vmem>>, %arg11: memref<8x2x128xf32, #tpu.memory_space<vmem>>) attributes {dimension_semantics = [#tpu.dimension_semantics<parallel>, #tpu.dimension_semantics<arbitrary>], iteration_bounds = array<i64: 1, 1>, scalar_prefetch = 0 : i64, scratch_operands = 3 : i64, tpu.core_type = #tpu.core_type<tc>, window_params = [{transform_indices = @transform_0, window_bounds = array<i64: 8, 2, 16>}, {pipeline_mode = #tpu.pipeline_mode<synchronous>, transform_indices = @transform_1, window_bounds = array<i64: 16, 128>}, {pipeline_mode = #tpu.pipeline_mode<synchronous>, transform_indices = @transform_2, window_bounds = array<i64: 32, 128>}, {pipeline_mode = #tpu.pipeline_mode<synchronous>, transform_indices = @transform_3, window_bounds = array<i64: 1, 128>}, {pipeline_mode = #tpu.pipeline_mode<synchronous>, transform_indices = @transform_4, window_bounds = array<i64: 32, 8>}, {pipeline_mode = #tpu.pipeline_mode<synchronous>, transform_indices = @transform_5, window_bounds = array<i64: 1, 8>}, {transform_indices = @transform_6, window_bounds = array<i64: 8, 2, 8>}]} {
    %c0_i32 = arith.constant 0 : i32
    %0 = arith.cmpi eq, %arg1, %c0_i32 : i32
    %1 = arith.extui %0 : i1 to i32
    %c0_i32_0 = arith.constant 0 : i32
    %2 = arith.cmpi ne, %1, %c0_i32_0 : i32
    scf.if %2 {
      %cst_139 = arith.constant 0.000000e+00 : f32
      %372 = vector.broadcast %cst_139 : f32 to vector<2x32xf32>
      %c0_140 = arith.constant 0 : index
      %c0_141 = arith.constant 0 : index
      %373 = vector.load %arg9[%c0_140, %c0_141] : memref<2x32xf32, #tpu.memory_space<vmem>>, vector<2x32xf32>
      tpu.vector_store %arg9[%c0_140, %c0_141], %372 {strides = array<i32>} : memref<2x32xf32, #tpu.memory_space<vmem>>, vector<2x32xf32>,
      %cst_142 = arith.constant 0.000000e+00 : f32
      %374 = vector.broadcast %cst_142 : f32 to vector<2x32xf32>
      %c0_143 = arith.constant 0 : index
      %c0_144 = arith.constant 0 : index
      %375 = vector.load %arg10[%c0_143, %c0_144] : memref<2x32xf32, #tpu.memory_space<vmem>>, vector<2x32xf32>
      tpu.vector_store %arg10[%c0_143, %c0_144], %374 {strides = array<i32>} : memref<2x32xf32, #tpu.memory_space<vmem>>, vector<2x32xf32>,
    } else {
    }
    %c0 = arith.constant 0 : index
    %c0_1 = arith.constant 0 : index
    %3 = vector.load %arg3[%c0, %c0_1] : memref<16x128xf32, #tpu.memory_space<vmem>>, vector<16x128xf32>
    %c0_2 = arith.constant 0 : index
    %c0_3 = arith.constant 0 : index
    %4 = vector.load %arg4[%c0_2, %c0_3] : memref<32x128xf32, #tpu.memory_space<vmem>>, vector<32x128xf32>
    %c0_4 = arith.constant 0 : index
    %c0_5 = arith.constant 0 : index
    %5 = vector.load %arg5[%c0_4, %c0_5] : memref<1x128xf32, #tpu.memory_space<vmem>>, vector<1x128xf32>
    %c0_6 = arith.constant 0 : index
    %c0_7 = arith.constant 0 : index
    %6 = vector.load %arg6[%c0_6, %c0_7] : memref<32x8xf32, #tpu.memory_space<vmem>>, vector<32x8xf32>
    %c0_8 = arith.constant 0 : index
    %c0_9 = arith.constant 0 : index
    %7 = vector.load %arg7[%c0_8, %c0_9] : memref<1x8xf32, #tpu.memory_space<vmem>>, vector<1x8xf32>
    %c0_10 = arith.constant 0 : index
    %c0_11 = arith.constant 0 : index
    %c0_12 = arith.constant 0 : index
    %8 = vector.load %arg2[%c0_10, %c0_11, %c0_12] : memref<8x2x16xf32, #tpu.memory_space<vmem>>, vector<1x2x16xf32>
    %9 = vector.shape_cast %8 : vector<1x2x16xf32> to vector<2x16xf32>
    %cst = arith.constant dense<0.000000e+00> : vector<2x128xf32>
    %10 = tpu.matmul %9, %3, %cst {dimension_numbers = #tpu.dot_dimension_numbers<[1], [0], [0], [1], [0, 0, 1, 1], [], []>} : vector<2x16xf32>, vector<16x128xf32>, vector<2x128xf32> -> vector<2x128xf32>
    %11 = vector.broadcast %5 : vector<1x128xf32> to vector<2x128xf32>
    %12 = arith.addf %10, %11 : vector<2x128xf32>
    %c0_13 = arith.constant 0 : index
    %c0_14 = arith.constant 0 : index
    %c0_15 = arith.constant 0 : index
    %13 = vector.load %arg11[%c0_13, %c0_14, %c0_15] : memref<8x2x128xf32, #tpu.memory_space<vmem>>, vector<1x2x128xf32>
    %14 = vector.shape_cast %13 : vector<1x2x128xf32> to vector<2x128xf32>
    %15 = vector.shape_cast %12 : vector<2x128xf32> to vector<1x2x128xf32>
    tpu.vector_store %arg11[%c0_13, %c0_14, %c0_15], %15 {strides = array<i32>} : memref<8x2x128xf32, #tpu.memory_space<vmem>>, vector<1x2x128xf32>,
    %c1 = arith.constant 1 : index
    %c0_16 = arith.constant 0 : index
    %c0_17 = arith.constant 0 : index
    %16 = vector.load %arg2[%c1, %c0_16, %c0_17] : memref<8x2x16xf32, #tpu.memory_space<vmem>>, vector<1x2x16xf32>
    %17 = vector.shape_cast %16 : vector<1x2x16xf32> to vector<2x16xf32>
    %cst_18 = arith.constant dense<0.000000e+00> : vector<2x128xf32>
    %18 = tpu.matmul %17, %3, %cst_18 {dimension_numbers = #tpu.dot_dimension_numbers<[1], [0], [0], [1], [0, 0, 1, 1], [], []>} : vector<2x16xf32>, vector<16x128xf32>, vector<2x128xf32> -> vector<2x128xf32>
    %19 = vector.broadcast %5 : vector<1x128xf32> to vector<2x128xf32>
    %20 = arith.addf %18, %19 : vector<2x128xf32>
    %c1_19 = arith.constant 1 : index
    %c0_20 = arith.constant 0 : index
    %c0_21 = arith.constant 0 : index
    %21 = vector.load %arg11[%c1_19, %c0_20, %c0_21] : memref<8x2x128xf32, #tpu.memory_space<vmem>>, vector<1x2x128xf32>
    %22 = vector.shape_cast %21 : vector<1x2x128xf32> to vector<2x128xf32>
    %23 = vector.shape_cast %20 : vector<2x128xf32> to vector<1x2x128xf32>
    tpu.vector_store %arg11[%c1_19, %c0_20, %c0_21], %23 {strides = array<i32>} : memref<8x2x128xf32, #tpu.memory_space<vmem>>, vector<1x2x128xf32>,
    %c2 = arith.constant 2 : index
    %c0_22 = arith.constant 0 : index
    %c0_23 = arith.constant 0 : index
    %24 = vector.load %arg2[%c2, %c0_22, %c0_23] : memref<8x2x16xf32, #tpu.memory_space<vmem>>, vector<1x2x16xf32>
    %25 = vector.shape_cast %24 : vector<1x2x16xf32> to vector<2x16xf32>
    %cst_24 = arith.constant dense<0.000000e+00> : vector<2x128xf32>
    %26 = tpu.matmul %25, %3, %cst_24 {dimension_numbers = #tpu.dot_dimension_numbers<[1], [0], [0], [1], [0, 0, 1, 1], [], []>} : vector<2x16xf32>, vector<16x128xf32>, vector<2x128xf32> -> vector<2x128xf32>
    %27 = vector.broadcast %5 : vector<1x128xf32> to vector<2x128xf32>
    %28 = arith.addf %26, %27 : vector<2x128xf32>
    %c2_25 = arith.constant 2 : index
    %c0_26 = arith.constant 0 : index
    %c0_27 = arith.constant 0 : index
    %29 = vector.load %arg11[%c2_25, %c0_26, %c0_27] : memref<8x2x128xf32, #tpu.memory_space<vmem>>, vector<1x2x128xf32>
    %30 = vector.shape_cast %29 : vector<1x2x128xf32> to vector<2x128xf32>
    %31 = vector.shape_cast %28 : vector<2x128xf32> to vector<1x2x128xf32>
    tpu.vector_store %arg11[%c2_25, %c0_26, %c0_27], %31 {strides = array<i32>} : memref<8x2x128xf32, #tpu.memory_space<vmem>>, vector<1x2x128xf32>,
    %c3 = arith.constant 3 : index
    %c0_28 = arith.constant 0 : index
    %c0_29 = arith.constant 0 : index
    %32 = vector.load %arg2[%c3, %c0_28, %c0_29] : memref<8x2x16xf32, #tpu.memory_space<vmem>>, vector<1x2x16xf32>
    %33 = vector.shape_cast %32 : vector<1x2x16xf32> to vector<2x16xf32>
    %cst_30 = arith.constant dense<0.000000e+00> : vector<2x128xf32>
    %34 = tpu.matmul %33, %3, %cst_30 {dimension_numbers = #tpu.dot_dimension_numbers<[1], [0], [0], [1], [0, 0, 1, 1], [], []>} : vector<2x16xf32>, vector<16x128xf32>, vector<2x128xf32> -> vector<2x128xf32>
    %35 = vector.broadcast %5 : vector<1x128xf32> to vector<2x128xf32>
    %36 = arith.addf %34, %35 : vector<2x128xf32>
    %c3_31 = arith.constant 3 : index
    %c0_32 = arith.constant 0 : index
    %c0_33 = arith.constant 0 : index
    %37 = vector.load %arg11[%c3_31, %c0_32, %c0_33] : memref<8x2x128xf32, #tpu.memory_space<vmem>>, vector<1x2x128xf32>
    %38 = vector.shape_cast %37 : vector<1x2x128xf32> to vector<2x128xf32>
    %39 = vector.shape_cast %36 : vector<2x128xf32> to vector<1x2x128xf32>
    tpu.vector_store %arg11[%c3_31, %c0_32, %c0_33], %39 {strides = array<i32>} : memref<8x2x128xf32, #tpu.memory_space<vmem>>, vector<1x2x128xf32>,
    %c4 = arith.constant 4 : index
    %c0_34 = arith.constant 0 : index
    %c0_35 = arith.constant 0 : index
    %40 = vector.load %arg2[%c4, %c0_34, %c0_35] : memref<8x2x16xf32, #tpu.memory_space<vmem>>, vector<1x2x16xf32>
    %41 = vector.shape_cast %40 : vector<1x2x16xf32> to vector<2x16xf32>
    %cst_36 = arith.constant dense<0.000000e+00> : vector<2x128xf32>
    %42 = tpu.matmul %41, %3, %cst_36 {dimension_numbers = #tpu.dot_dimension_numbers<[1], [0], [0], [1], [0, 0, 1, 1], [], []>} : vector<2x16xf32>, vector<16x128xf32>, vector<2x128xf32> -> vector<2x128xf32>
    %43 = vector.broadcast %5 : vector<1x128xf32> to vector<2x128xf32>
    %44 = arith.addf %42, %43 : vector<2x128xf32>
    %c4_37 = arith.constant 4 : index
    %c0_38 = arith.constant 0 : index
    %c0_39 = arith.constant 0 : index
    %45 = vector.load %arg11[%c4_37, %c0_38, %c0_39] : memref<8x2x128xf32, #tpu.memory_space<vmem>>, vector<1x2x128xf32>
    %46 = vector.shape_cast %45 : vector<1x2x128xf32> to vector<2x128xf32>
    %47 = vector.shape_cast %44 : vector<2x128xf32> to vector<1x2x128xf32>
    tpu.vector_store %arg11[%c4_37, %c0_38, %c0_39], %47 {strides = array<i32>} : memref<8x2x128xf32, #tpu.memory_space<vmem>>, vector<1x2x128xf32>,
    %c5 = arith.constant 5 : index
    %c0_40 = arith.constant 0 : index
    %c0_41 = arith.constant 0 : index
    %48 = vector.load %arg2[%c5, %c0_40, %c0_41] : memref<8x2x16xf32, #tpu.memory_space<vmem>>, vector<1x2x16xf32>
    %49 = vector.shape_cast %48 : vector<1x2x16xf32> to vector<2x16xf32>
    %cst_42 = arith.constant dense<0.000000e+00> : vector<2x128xf32>
    %50 = tpu.matmul %49, %3, %cst_42 {dimension_numbers = #tpu.dot_dimension_numbers<[1], [0], [0], [1], [0, 0, 1, 1], [], []>} : vector<2x16xf32>, vector<16x128xf32>, vector<2x128xf32> -> vector<2x128xf32>
    %51 = vector.broadcast %5 : vector<1x128xf32> to vector<2x128xf32>
    %52 = arith.addf %50, %51 : vector<2x128xf32>
    %c5_43 = arith.constant 5 : index
    %c0_44 = arith.constant 0 : index
    %c0_45 = arith.constant 0 : index
    %53 = vector.load %arg11[%c5_43, %c0_44, %c0_45] : memref<8x2x128xf32, #tpu.memory_space<vmem>>, vector<1x2x128xf32>
    %54 = vector.shape_cast %53 : vector<1x2x128xf32> to vector<2x128xf32>
    %55 = vector.shape_cast %52 : vector<2x128xf32> to vector<1x2x128xf32>
    tpu.vector_store %arg11[%c5_43, %c0_44, %c0_45], %55 {strides = array<i32>} : memref<8x2x128xf32, #tpu.memory_space<vmem>>, vector<1x2x128xf32>,
    %c6 = arith.constant 6 : index
    %c0_46 = arith.constant 0 : index
    %c0_47 = arith.constant 0 : index
    %56 = vector.load %arg2[%c6, %c0_46, %c0_47] : memref<8x2x16xf32, #tpu.memory_space<vmem>>, vector<1x2x16xf32>
    %57 = vector.shape_cast %56 : vector<1x2x16xf32> to vector<2x16xf32>
    %cst_48 = arith.constant dense<0.000000e+00> : vector<2x128xf32>
    %58 = tpu.matmul %57, %3, %cst_48 {dimension_numbers = #tpu.dot_dimension_numbers<[1], [0], [0], [1], [0, 0, 1, 1], [], []>} : vector<2x16xf32>, vector<16x128xf32>, vector<2x128xf32> -> vector<2x128xf32>
    %59 = vector.broadcast %5 : vector<1x128xf32> to vector<2x128xf32>
    %60 = arith.addf %58, %59 : vector<2x128xf32>
    %c6_49 = arith.constant 6 : index
    %c0_50 = arith.constant 0 : index
    %c0_51 = arith.constant 0 : index
    %61 = vector.load %arg11[%c6_49, %c0_50, %c0_51] : memref<8x2x128xf32, #tpu.memory_space<vmem>>, vector<1x2x128xf32>
    %62 = vector.shape_cast %61 : vector<1x2x128xf32> to vector<2x128xf32>
    %63 = vector.shape_cast %60 : vector<2x128xf32> to vector<1x2x128xf32>
    tpu.vector_store %arg11[%c6_49, %c0_50, %c0_51], %63 {strides = array<i32>} : memref<8x2x128xf32, #tpu.memory_space<vmem>>, vector<1x2x128xf32>,
    %c7 = arith.constant 7 : index
    %c0_52 = arith.constant 0 : index
    %c0_53 = arith.constant 0 : index
    %64 = vector.load %arg2[%c7, %c0_52, %c0_53] : memref<8x2x16xf32, #tpu.memory_space<vmem>>, vector<1x2x16xf32>
    %65 = vector.shape_cast %64 : vector<1x2x16xf32> to vector<2x16xf32>
    %cst_54 = arith.constant dense<0.000000e+00> : vector<2x128xf32>
    %66 = tpu.matmul %65, %3, %cst_54 {dimension_numbers = #tpu.dot_dimension_numbers<[1], [0], [0], [1], [0, 0, 1, 1], [], []>} : vector<2x16xf32>, vector<16x128xf32>, vector<2x128xf32> -> vector<2x128xf32>
    %67 = vector.broadcast %5 : vector<1x128xf32> to vector<2x128xf32>
    %68 = arith.addf %66, %67 : vector<2x128xf32>
    %c7_55 = arith.constant 7 : index
    %c0_56 = arith.constant 0 : index
    %c0_57 = arith.constant 0 : index
    %69 = vector.load %arg11[%c7_55, %c0_56, %c0_57] : memref<8x2x128xf32, #tpu.memory_space<vmem>>, vector<1x2x128xf32>
    %70 = vector.shape_cast %69 : vector<1x2x128xf32> to vector<2x128xf32>
    %71 = vector.shape_cast %68 : vector<2x128xf32> to vector<1x2x128xf32>
    tpu.vector_store %arg11[%c7_55, %c0_56, %c0_57], %71 {strides = array<i32>} : memref<8x2x128xf32, #tpu.memory_space<vmem>>, vector<1x2x128xf32>,
    %c0_58 = arith.constant 0 : index
    %c0_59 = arith.constant 0 : index
    %72 = vector.load %arg9[%c0_58, %c0_59] : memref<2x32xf32, #tpu.memory_space<vmem>>, vector<2x32xf32>
    %c0_60 = arith.constant 0 : index
    %c0_61 = arith.constant 0 : index
    %73 = vector.load %arg10[%c0_60, %c0_61] : memref<2x32xf32, #tpu.memory_space<vmem>>, vector<2x32xf32>
    %c0_i32_62 = arith.constant 0 : i32
    %74 = arith.index_cast %c0_i32_62 : i32 to index
    %c0_63 = arith.constant 0 : index
    %c0_64 = arith.constant 0 : index
    %75 = vector.load %arg11[%74, %c0_63, %c0_64] : memref<8x2x128xf32, #tpu.memory_space<vmem>>, vector<1x2x128xf32>
    %76 = vector.shape_cast %75 : vector<1x2x128xf32> to vector<2x128xf32>
    %cst_65 = arith.constant dense<0.000000e+00> : vector<2x128xf32>
    %77 = tpu.matmul %72, %4, %cst_65 {dimension_numbers = #tpu.dot_dimension_numbers<[1], [0], [0], [1], [0, 0, 1, 1], [], []>} : vector<2x32xf32>, vector<32x128xf32>, vector<2x128xf32> -> vector<2x128xf32>
    %78 = arith.addf %76, %77 : vector<2x128xf32>
    %79 = vector.extract_strided_slice %78 {offsets = [0, 0], sizes = [2, 32], strides = [1, 1]} : vector<2x128xf32> to vector<2x32xf32>
    %80 = arith.negf %79 : vector<2x32xf32>
    %81 = math.exp %80 : vector<2x32xf32>
    %cst_66 = arith.constant 1.000000e+00 : f32
    %82 = vector.broadcast %cst_66 : f32 to vector<2x32xf32>
    %83 = arith.addf %82, %81 : vector<2x32xf32>
    %84 = arith.divf %82, %83 : vector<2x32xf32>
    %85 = vector.extract_strided_slice %78 {offsets = [0, 32], sizes = [2, 32], strides = [1, 1]} : vector<2x128xf32> to vector<2x32xf32>
    %86 = arith.negf %85 : vector<2x32xf32>
    %87 = math.exp %86 : vector<2x32xf32>
    %cst_67 = arith.constant 1.000000e+00 : f32
    %88 = vector.broadcast %cst_67 : f32 to vector<2x32xf32>
    %89 = arith.addf %88, %87 : vector<2x32xf32>
    %90 = arith.divf %88, %89 : vector<2x32xf32>
    %91 = vector.extract_strided_slice %78 {offsets = [0, 64], sizes = [2, 32], strides = [1, 1]} : vector<2x128xf32> to vector<2x32xf32>
    %92 = math.tanh %91 : vector<2x32xf32>
    %93 = vector.extract_strided_slice %78 {offsets = [0, 96], sizes = [2, 32], strides = [1, 1]} : vector<2x128xf32> to vector<2x32xf32>
    %94 = arith.negf %93 : vector<2x32xf32>
    %95 = math.exp %94 : vector<2x32xf32>
    %cst_68 = arith.constant 1.000000e+00 : f32
    %96 = vector.broadcast %cst_68 : f32 to vector<2x32xf32>
    %97 = arith.addf %96, %95 : vector<2x32xf32>
    %98 = arith.divf %96, %97 : vector<2x32xf32>
    %99 = arith.mulf %90, %73 : vector<2x32xf32>
    %100 = arith.mulf %84, %92 : vector<2x32xf32>
    %101 = arith.addf %99, %100 : vector<2x32xf32>
    %102 = math.tanh %101 : vector<2x32xf32>
    %103 = arith.mulf %98, %102 : vector<2x32xf32>
    %cst_69 = arith.constant dense<0.000000e+00> : vector<2x8xf32>
    %104 = tpu.matmul %103, %6, %cst_69 {dimension_numbers = #tpu.dot_dimension_numbers<[1], [0], [0], [1], [0, 0, 1, 1], [], []>} : vector<2x32xf32>, vector<32x8xf32>, vector<2x8xf32> -> vector<2x8xf32>
    %105 = vector.broadcast %7 : vector<1x8xf32> to vector<2x8xf32>
    %106 = arith.addf %104, %105 : vector<2x8xf32>
    %107 = arith.index_cast %c0_i32_62 : i32 to index
    %c0_70 = arith.constant 0 : index
    %c0_71 = arith.constant 0 : index
    %108 = vector.load %arg8[%107, %c0_70, %c0_71] : memref<8x2x8xf32, #tpu.memory_space<vmem>>, vector<1x2x8xf32>
    %109 = vector.shape_cast %108 : vector<1x2x8xf32> to vector<2x8xf32>
    %110 = vector.shape_cast %106 : vector<2x8xf32> to vector<1x2x8xf32>
    tpu.vector_store %arg8[%107, %c0_70, %c0_71], %110 {strides = array<i32>} : memref<8x2x8xf32, #tpu.memory_space<vmem>>, vector<1x2x8xf32>,
    %c1_i32 = arith.constant 1 : i32
    %111 = arith.index_cast %c1_i32 : i32 to index
    %c0_72 = arith.constant 0 : index
    %c0_73 = arith.constant 0 : index
    %112 = vector.load %arg11[%111, %c0_72, %c0_73] : memref<8x2x128xf32, #tpu.memory_space<vmem>>, vector<1x2x128xf32>
    %113 = vector.shape_cast %112 : vector<1x2x128xf32> to vector<2x128xf32>
    %cst_74 = arith.constant dense<0.000000e+00> : vector<2x128xf32>
    %114 = tpu.matmul %103, %4, %cst_74 {dimension_numbers = #tpu.dot_dimension_numbers<[1], [0], [0], [1], [0, 0, 1, 1], [], []>} : vector<2x32xf32>, vector<32x128xf32>, vector<2x128xf32> -> vector<2x128xf32>
    %115 = arith.addf %113, %114 : vector<2x128xf32>
    %116 = vector.extract_strided_slice %115 {offsets = [0, 0], sizes = [2, 32], strides = [1, 1]} : vector<2x128xf32> to vector<2x32xf32>
    %117 = arith.negf %116 : vector<2x32xf32>
    %118 = math.exp %117 : vector<2x32xf32>
    %cst_75 = arith.constant 1.000000e+00 : f32
    %119 = vector.broadcast %cst_75 : f32 to vector<2x32xf32>
    %120 = arith.addf %119, %118 : vector<2x32xf32>
    %121 = arith.divf %119, %120 : vector<2x32xf32>
    %122 = vector.extract_strided_slice %115 {offsets = [0, 32], sizes = [2, 32], strides = [1, 1]} : vector<2x128xf32> to vector<2x32xf32>
    %123 = arith.negf %122 : vector<2x32xf32>
    %124 = math.exp %123 : vector<2x32xf32>
    %cst_76 = arith.constant 1.000000e+00 : f32
    %125 = vector.broadcast %cst_76 : f32 to vector<2x32xf32>
    %126 = arith.addf %125, %124 : vector<2x32xf32>
    %127 = arith.divf %125, %126 : vector<2x32xf32>
    %128 = vector.extract_strided_slice %115 {offsets = [0, 64], sizes = [2, 32], strides = [1, 1]} : vector<2x128xf32> to vector<2x32xf32>
    %129 = math.tanh %128 : vector<2x32xf32>
    %130 = vector.extract_strided_slice %115 {offsets = [0, 96], sizes = [2, 32], strides = [1, 1]} : vector<2x128xf32> to vector<2x32xf32>
    %131 = arith.negf %130 : vector<2x32xf32>
    %132 = math.exp %131 : vector<2x32xf32>
    %cst_77 = arith.constant 1.000000e+00 : f32
    %133 = vector.broadcast %cst_77 : f32 to vector<2x32xf32>
    %134 = arith.addf %133, %132 : vector<2x32xf32>
    %135 = arith.divf %133, %134 : vector<2x32xf32>
    %136 = arith.mulf %127, %101 : vector<2x32xf32>
    %137 = arith.mulf %121, %129 : vector<2x32xf32>
    %138 = arith.addf %136, %137 : vector<2x32xf32>
    %139 = math.tanh %138 : vector<2x32xf32>
    %140 = arith.mulf %135, %139 : vector<2x32xf32>
    %cst_78 = arith.constant dense<0.000000e+00> : vector<2x8xf32>
    %141 = tpu.matmul %140, %6, %cst_78 {dimension_numbers = #tpu.dot_dimension_numbers<[1], [0], [0], [1], [0, 0, 1, 1], [], []>} : vector<2x32xf32>, vector<32x8xf32>, vector<2x8xf32> -> vector<2x8xf32>
    %142 = vector.broadcast %7 : vector<1x8xf32> to vector<2x8xf32>
    %143 = arith.addf %141, %142 : vector<2x8xf32>
    %144 = arith.index_cast %c1_i32 : i32 to index
    %c0_79 = arith.constant 0 : index
    %c0_80 = arith.constant 0 : index
    %145 = vector.load %arg8[%144, %c0_79, %c0_80] : memref<8x2x8xf32, #tpu.memory_space<vmem>>, vector<1x2x8xf32>
    %146 = vector.shape_cast %145 : vector<1x2x8xf32> to vector<2x8xf32>
    %147 = vector.shape_cast %143 : vector<2x8xf32> to vector<1x2x8xf32>
    tpu.vector_store %arg8[%144, %c0_79, %c0_80], %147 {strides = array<i32>} : memref<8x2x8xf32, #tpu.memory_space<vmem>>, vector<1x2x8xf32>,
    %c2_i32 = arith.constant 2 : i32
    %148 = arith.index_cast %c2_i32 : i32 to index
    %c0_81 = arith.constant 0 : index
    %c0_82 = arith.constant 0 : index
    %149 = vector.load %arg11[%148, %c0_81, %c0_82] : memref<8x2x128xf32, #tpu.memory_space<vmem>>, vector<1x2x128xf32>
    %150 = vector.shape_cast %149 : vector<1x2x128xf32> to vector<2x128xf32>
    %cst_83 = arith.constant dense<0.000000e+00> : vector<2x128xf32>
    %151 = tpu.matmul %140, %4, %cst_83 {dimension_numbers = #tpu.dot_dimension_numbers<[1], [0], [0], [1], [0, 0, 1, 1], [], []>} : vector<2x32xf32>, vector<32x128xf32>, vector<2x128xf32> -> vector<2x128xf32>
    %152 = arith.addf %150, %151 : vector<2x128xf32>
    %153 = vector.extract_strided_slice %152 {offsets = [0, 0], sizes = [2, 32], strides = [1, 1]} : vector<2x128xf32> to vector<2x32xf32>
    %154 = arith.negf %153 : vector<2x32xf32>
    %155 = math.exp %154 : vector<2x32xf32>
    %cst_84 = arith.constant 1.000000e+00 : f32
    %156 = vector.broadcast %cst_84 : f32 to vector<2x32xf32>
    %157 = arith.addf %156, %155 : vector<2x32xf32>
    %158 = arith.divf %156, %157 : vector<2x32xf32>
    %159 = vector.extract_strided_slice %152 {offsets = [0, 32], sizes = [2, 32], strides = [1, 1]} : vector<2x128xf32> to vector<2x32xf32>
    %160 = arith.negf %159 : vector<2x32xf32>
    %161 = math.exp %160 : vector<2x32xf32>
    %cst_85 = arith.constant 1.000000e+00 : f32
    %162 = vector.broadcast %cst_85 : f32 to vector<2x32xf32>
    %163 = arith.addf %162, %161 : vector<2x32xf32>
    %164 = arith.divf %162, %163 : vector<2x32xf32>
    %165 = vector.extract_strided_slice %152 {offsets = [0, 64], sizes = [2, 32], strides = [1, 1]} : vector<2x128xf32> to vector<2x32xf32>
    %166 = math.tanh %165 : vector<2x32xf32>
    %167 = vector.extract_strided_slice %152 {offsets = [0, 96], sizes = [2, 32], strides = [1, 1]} : vector<2x128xf32> to vector<2x32xf32>
    %168 = arith.negf %167 : vector<2x32xf32>
    %169 = math.exp %168 : vector<2x32xf32>
    %cst_86 = arith.constant 1.000000e+00 : f32
    %170 = vector.broadcast %cst_86 : f32 to vector<2x32xf32>
    %171 = arith.addf %170, %169 : vector<2x32xf32>
    %172 = arith.divf %170, %171 : vector<2x32xf32>
    %173 = arith.mulf %164, %138 : vector<2x32xf32>
    %174 = arith.mulf %158, %166 : vector<2x32xf32>
    %175 = arith.addf %173, %174 : vector<2x32xf32>
    %176 = math.tanh %175 : vector<2x32xf32>
    %177 = arith.mulf %172, %176 : vector<2x32xf32>
    %cst_87 = arith.constant dense<0.000000e+00> : vector<2x8xf32>
    %178 = tpu.matmul %177, %6, %cst_87 {dimension_numbers = #tpu.dot_dimension_numbers<[1], [0], [0], [1], [0, 0, 1, 1], [], []>} : vector<2x32xf32>, vector<32x8xf32>, vector<2x8xf32> -> vector<2x8xf32>
    %179 = vector.broadcast %7 : vector<1x8xf32> to vector<2x8xf32>
    %180 = arith.addf %178, %179 : vector<2x8xf32>
    %181 = arith.index_cast %c2_i32 : i32 to index
    %c0_88 = arith.constant 0 : index
    %c0_89 = arith.constant 0 : index
    %182 = vector.load %arg8[%181, %c0_88, %c0_89] : memref<8x2x8xf32, #tpu.memory_space<vmem>>, vector<1x2x8xf32>
    %183 = vector.shape_cast %182 : vector<1x2x8xf32> to vector<2x8xf32>
    %184 = vector.shape_cast %180 : vector<2x8xf32> to vector<1x2x8xf32>
    tpu.vector_store %arg8[%181, %c0_88, %c0_89], %184 {strides = array<i32>} : memref<8x2x8xf32, #tpu.memory_space<vmem>>, vector<1x2x8xf32>,
    %c3_i32 = arith.constant 3 : i32
    %185 = arith.index_cast %c3_i32 : i32 to index
    %c0_90 = arith.constant 0 : index
    %c0_91 = arith.constant 0 : index
    %186 = vector.load %arg11[%185, %c0_90, %c0_91] : memref<8x2x128xf32, #tpu.memory_space<vmem>>, vector<1x2x128xf32>
    %187 = vector.shape_cast %186 : vector<1x2x128xf32> to vector<2x128xf32>
    %cst_92 = arith.constant dense<0.000000e+00> : vector<2x128xf32>
    %188 = tpu.matmul %177, %4, %cst_92 {dimension_numbers = #tpu.dot_dimension_numbers<[1], [0], [0], [1], [0, 0, 1, 1], [], []>} : vector<2x32xf32>, vector<32x128xf32>, vector<2x128xf32> -> vector<2x128xf32>
    %189 = arith.addf %187, %188 : vector<2x128xf32>
    %190 = vector.extract_strided_slice %189 {offsets = [0, 0], sizes = [2, 32], strides = [1, 1]} : vector<2x128xf32> to vector<2x32xf32>
    %191 = arith.negf %190 : vector<2x32xf32>
    %192 = math.exp %191 : vector<2x32xf32>
    %cst_93 = arith.constant 1.000000e+00 : f32
    %193 = vector.broadcast %cst_93 : f32 to vector<2x32xf32>
    %194 = arith.addf %193, %192 : vector<2x32xf32>
    %195 = arith.divf %193, %194 : vector<2x32xf32>
    %196 = vector.extract_strided_slice %189 {offsets = [0, 32], sizes = [2, 32], strides = [1, 1]} : vector<2x128xf32> to vector<2x32xf32>
    %197 = arith.negf %196 : vector<2x32xf32>
    %198 = math.exp %197 : vector<2x32xf32>
    %cst_94 = arith.constant 1.000000e+00 : f32
    %199 = vector.broadcast %cst_94 : f32 to vector<2x32xf32>
    %200 = arith.addf %199, %198 : vector<2x32xf32>
    %201 = arith.divf %199, %200 : vector<2x32xf32>
    %202 = vector.extract_strided_slice %189 {offsets = [0, 64], sizes = [2, 32], strides = [1, 1]} : vector<2x128xf32> to vector<2x32xf32>
    %203 = math.tanh %202 : vector<2x32xf32>
    %204 = vector.extract_strided_slice %189 {offsets = [0, 96], sizes = [2, 32], strides = [1, 1]} : vector<2x128xf32> to vector<2x32xf32>
    %205 = arith.negf %204 : vector<2x32xf32>
    %206 = math.exp %205 : vector<2x32xf32>
    %cst_95 = arith.constant 1.000000e+00 : f32
    %207 = vector.broadcast %cst_95 : f32 to vector<2x32xf32>
    %208 = arith.addf %207, %206 : vector<2x32xf32>
    %209 = arith.divf %207, %208 : vector<2x32xf32>
    %210 = arith.mulf %201, %175 : vector<2x32xf32>
    %211 = arith.mulf %195, %203 : vector<2x32xf32>
    %212 = arith.addf %210, %211 : vector<2x32xf32>
    %213 = math.tanh %212 : vector<2x32xf32>
    %214 = arith.mulf %209, %213 : vector<2x32xf32>
    %cst_96 = arith.constant dense<0.000000e+00> : vector<2x8xf32>
    %215 = tpu.matmul %214, %6, %cst_96 {dimension_numbers = #tpu.dot_dimension_numbers<[1], [0], [0], [1], [0, 0, 1, 1], [], []>} : vector<2x32xf32>, vector<32x8xf32>, vector<2x8xf32> -> vector<2x8xf32>
    %216 = vector.broadcast %7 : vector<1x8xf32> to vector<2x8xf32>
    %217 = arith.addf %215, %216 : vector<2x8xf32>
    %218 = arith.index_cast %c3_i32 : i32 to index
    %c0_97 = arith.constant 0 : index
    %c0_98 = arith.constant 0 : index
    %219 = vector.load %arg8[%218, %c0_97, %c0_98] : memref<8x2x8xf32, #tpu.memory_space<vmem>>, vector<1x2x8xf32>
    %220 = vector.shape_cast %219 : vector<1x2x8xf32> to vector<2x8xf32>
    %221 = vector.shape_cast %217 : vector<2x8xf32> to vector<1x2x8xf32>
    tpu.vector_store %arg8[%218, %c0_97, %c0_98], %221 {strides = array<i32>} : memref<8x2x8xf32, #tpu.memory_space<vmem>>, vector<1x2x8xf32>,
    %c4_i32 = arith.constant 4 : i32
    %222 = arith.index_cast %c4_i32 : i32 to index
    %c0_99 = arith.constant 0 : index
    %c0_100 = arith.constant 0 : index
    %223 = vector.load %arg11[%222, %c0_99, %c0_100] : memref<8x2x128xf32, #tpu.memory_space<vmem>>, vector<1x2x128xf32>
    %224 = vector.shape_cast %223 : vector<1x2x128xf32> to vector<2x128xf32>
    %cst_101 = arith.constant dense<0.000000e+00> : vector<2x128xf32>
    %225 = tpu.matmul %214, %4, %cst_101 {dimension_numbers = #tpu.dot_dimension_numbers<[1], [0], [0], [1], [0, 0, 1, 1], [], []>} : vector<2x32xf32>, vector<32x128xf32>, vector<2x128xf32> -> vector<2x128xf32>
    %226 = arith.addf %224, %225 : vector<2x128xf32>
    %227 = vector.extract_strided_slice %226 {offsets = [0, 0], sizes = [2, 32], strides = [1, 1]} : vector<2x128xf32> to vector<2x32xf32>
    %228 = arith.negf %227 : vector<2x32xf32>
    %229 = math.exp %228 : vector<2x32xf32>
    %cst_102 = arith.constant 1.000000e+00 : f32
    %230 = vector.broadcast %cst_102 : f32 to vector<2x32xf32>
    %231 = arith.addf %230, %229 : vector<2x32xf32>
    %232 = arith.divf %230, %231 : vector<2x32xf32>
    %233 = vector.extract_strided_slice %226 {offsets = [0, 32], sizes = [2, 32], strides = [1, 1]} : vector<2x128xf32> to vector<2x32xf32>
    %234 = arith.negf %233 : vector<2x32xf32>
    %235 = math.exp %234 : vector<2x32xf32>
    %cst_103 = arith.constant 1.000000e+00 : f32
    %236 = vector.broadcast %cst_103 : f32 to vector<2x32xf32>
    %237 = arith.addf %236, %235 : vector<2x32xf32>
    %238 = arith.divf %236, %237 : vector<2x32xf32>
    %239 = vector.extract_strided_slice %226 {offsets = [0, 64], sizes = [2, 32], strides = [1, 1]} : vector<2x128xf32> to vector<2x32xf32>
    %240 = math.tanh %239 : vector<2x32xf32>
    %241 = vector.extract_strided_slice %226 {offsets = [0, 96], sizes = [2, 32], strides = [1, 1]} : vector<2x128xf32> to vector<2x32xf32>
    %242 = arith.negf %241 : vector<2x32xf32>
    %243 = math.exp %242 : vector<2x32xf32>
    %cst_104 = arith.constant 1.000000e+00 : f32
    %244 = vector.broadcast %cst_104 : f32 to vector<2x32xf32>
    %245 = arith.addf %244, %243 : vector<2x32xf32>
    %246 = arith.divf %244, %245 : vector<2x32xf32>
    %247 = arith.mulf %238, %212 : vector<2x32xf32>
    %248 = arith.mulf %232, %240 : vector<2x32xf32>
    %249 = arith.addf %247, %248 : vector<2x32xf32>
    %250 = math.tanh %249 : vector<2x32xf32>
    %251 = arith.mulf %246, %250 : vector<2x32xf32>
    %cst_105 = arith.constant dense<0.000000e+00> : vector<2x8xf32>
    %252 = tpu.matmul %251, %6, %cst_105 {dimension_numbers = #tpu.dot_dimension_numbers<[1], [0], [0], [1], [0, 0, 1, 1], [], []>} : vector<2x32xf32>, vector<32x8xf32>, vector<2x8xf32> -> vector<2x8xf32>
    %253 = vector.broadcast %7 : vector<1x8xf32> to vector<2x8xf32>
    %254 = arith.addf %252, %253 : vector<2x8xf32>
    %255 = arith.index_cast %c4_i32 : i32 to index
    %c0_106 = arith.constant 0 : index
    %c0_107 = arith.constant 0 : index
    %256 = vector.load %arg8[%255, %c0_106, %c0_107] : memref<8x2x8xf32, #tpu.memory_space<vmem>>, vector<1x2x8xf32>
    %257 = vector.shape_cast %256 : vector<1x2x8xf32> to vector<2x8xf32>
    %258 = vector.shape_cast %254 : vector<2x8xf32> to vector<1x2x8xf32>
    tpu.vector_store %arg8[%255, %c0_106, %c0_107], %258 {strides = array<i32>} : memref<8x2x8xf32, #tpu.memory_space<vmem>>, vector<1x2x8xf32>,
    %c5_i32 = arith.constant 5 : i32
    %259 = arith.index_cast %c5_i32 : i32 to index
    %c0_108 = arith.constant 0 : index
    %c0_109 = arith.constant 0 : index
    %260 = vector.load %arg11[%259, %c0_108, %c0_109] : memref<8x2x128xf32, #tpu.memory_space<vmem>>, vector<1x2x128xf32>
    %261 = vector.shape_cast %260 : vector<1x2x128xf32> to vector<2x128xf32>
    %cst_110 = arith.constant dense<0.000000e+00> : vector<2x128xf32>
    %262 = tpu.matmul %251, %4, %cst_110 {dimension_numbers = #tpu.dot_dimension_numbers<[1], [0], [0], [1], [0, 0, 1, 1], [], []>} : vector<2x32xf32>, vector<32x128xf32>, vector<2x128xf32> -> vector<2x128xf32>
    %263 = arith.addf %261, %262 : vector<2x128xf32>
    %264 = vector.extract_strided_slice %263 {offsets = [0, 0], sizes = [2, 32], strides = [1, 1]} : vector<2x128xf32> to vector<2x32xf32>
    %265 = arith.negf %264 : vector<2x32xf32>
    %266 = math.exp %265 : vector<2x32xf32>
    %cst_111 = arith.constant 1.000000e+00 : f32
    %267 = vector.broadcast %cst_111 : f32 to vector<2x32xf32>
    %268 = arith.addf %267, %266 : vector<2x32xf32>
    %269 = arith.divf %267, %268 : vector<2x32xf32>
    %270 = vector.extract_strided_slice %263 {offsets = [0, 32], sizes = [2, 32], strides = [1, 1]} : vector<2x128xf32> to vector<2x32xf32>
    %271 = arith.negf %270 : vector<2x32xf32>
    %272 = math.exp %271 : vector<2x32xf32>
    %cst_112 = arith.constant 1.000000e+00 : f32
    %273 = vector.broadcast %cst_112 : f32 to vector<2x32xf32>
    %274 = arith.addf %273, %272 : vector<2x32xf32>
    %275 = arith.divf %273, %274 : vector<2x32xf32>
    %276 = vector.extract_strided_slice %263 {offsets = [0, 64], sizes = [2, 32], strides = [1, 1]} : vector<2x128xf32> to vector<2x32xf32>
    %277 = math.tanh %276 : vector<2x32xf32>
    %278 = vector.extract_strided_slice %263 {offsets = [0, 96], sizes = [2, 32], strides = [1, 1]} : vector<2x128xf32> to vector<2x32xf32>
    %279 = arith.negf %278 : vector<2x32xf32>
    %280 = math.exp %279 : vector<2x32xf32>
    %cst_113 = arith.constant 1.000000e+00 : f32
    %281 = vector.broadcast %cst_113 : f32 to vector<2x32xf32>
    %282 = arith.addf %281, %280 : vector<2x32xf32>
    %283 = arith.divf %281, %282 : vector<2x32xf32>
    %284 = arith.mulf %275, %249 : vector<2x32xf32>
    %285 = arith.mulf %269, %277 : vector<2x32xf32>
    %286 = arith.addf %284, %285 : vector<2x32xf32>
    %287 = math.tanh %286 : vector<2x32xf32>
    %288 = arith.mulf %283, %287 : vector<2x32xf32>
    %cst_114 = arith.constant dense<0.000000e+00> : vector<2x8xf32>
    %289 = tpu.matmul %288, %6, %cst_114 {dimension_numbers = #tpu.dot_dimension_numbers<[1], [0], [0], [1], [0, 0, 1, 1], [], []>} : vector<2x32xf32>, vector<32x8xf32>, vector<2x8xf32> -> vector<2x8xf32>
    %290 = vector.broadcast %7 : vector<1x8xf32> to vector<2x8xf32>
    %291 = arith.addf %289, %290 : vector<2x8xf32>
    %292 = arith.index_cast %c5_i32 : i32 to index
    %c0_115 = arith.constant 0 : index
    %c0_116 = arith.constant 0 : index
    %293 = vector.load %arg8[%292, %c0_115, %c0_116] : memref<8x2x8xf32, #tpu.memory_space<vmem>>, vector<1x2x8xf32>
    %294 = vector.shape_cast %293 : vector<1x2x8xf32> to vector<2x8xf32>
    %295 = vector.shape_cast %291 : vector<2x8xf32> to vector<1x2x8xf32>
    tpu.vector_store %arg8[%292, %c0_115, %c0_116], %295 {strides = array<i32>} : memref<8x2x8xf32, #tpu.memory_space<vmem>>, vector<1x2x8xf32>,
    %c6_i32 = arith.constant 6 : i32
    %296 = arith.index_cast %c6_i32 : i32 to index
    %c0_117 = arith.constant 0 : index
    %c0_118 = arith.constant 0 : index
    %297 = vector.load %arg11[%296, %c0_117, %c0_118] : memref<8x2x128xf32, #tpu.memory_space<vmem>>, vector<1x2x128xf32>
    %298 = vector.shape_cast %297 : vector<1x2x128xf32> to vector<2x128xf32>
    %cst_119 = arith.constant dense<0.000000e+00> : vector<2x128xf32>
    %299 = tpu.matmul %288, %4, %cst_119 {dimension_numbers = #tpu.dot_dimension_numbers<[1], [0], [0], [1], [0, 0, 1, 1], [], []>} : vector<2x32xf32>, vector<32x128xf32>, vector<2x128xf32> -> vector<2x128xf32>
    %300 = arith.addf %298, %299 : vector<2x128xf32>
    %301 = vector.extract_strided_slice %300 {offsets = [0, 0], sizes = [2, 32], strides = [1, 1]} : vector<2x128xf32> to vector<2x32xf32>
    %302 = arith.negf %301 : vector<2x32xf32>
    %303 = math.exp %302 : vector<2x32xf32>
    %cst_120 = arith.constant 1.000000e+00 : f32
    %304 = vector.broadcast %cst_120 : f32 to vector<2x32xf32>
    %305 = arith.addf %304, %303 : vector<2x32xf32>
    %306 = arith.divf %304, %305 : vector<2x32xf32>
    %307 = vector.extract_strided_slice %300 {offsets = [0, 32], sizes = [2, 32], strides = [1, 1]} : vector<2x128xf32> to vector<2x32xf32>
    %308 = arith.negf %307 : vector<2x32xf32>
    %309 = math.exp %308 : vector<2x32xf32>
    %cst_121 = arith.constant 1.000000e+00 : f32
    %310 = vector.broadcast %cst_121 : f32 to vector<2x32xf32>
    %311 = arith.addf %310, %309 : vector<2x32xf32>
    %312 = arith.divf %310, %311 : vector<2x32xf32>
    %313 = vector.extract_strided_slice %300 {offsets = [0, 64], sizes = [2, 32], strides = [1, 1]} : vector<2x128xf32> to vector<2x32xf32>
    %314 = math.tanh %313 : vector<2x32xf32>
    %315 = vector.extract_strided_slice %300 {offsets = [0, 96], sizes = [2, 32], strides = [1, 1]} : vector<2x128xf32> to vector<2x32xf32>
    %316 = arith.negf %315 : vector<2x32xf32>
    %317 = math.exp %316 : vector<2x32xf32>
    %cst_122 = arith.constant 1.000000e+00 : f32
    %318 = vector.broadcast %cst_122 : f32 to vector<2x32xf32>
    %319 = arith.addf %318, %317 : vector<2x32xf32>
    %320 = arith.divf %318, %319 : vector<2x32xf32>
    %321 = arith.mulf %312, %286 : vector<2x32xf32>
    %322 = arith.mulf %306, %314 : vector<2x32xf32>
    %323 = arith.addf %321, %322 : vector<2x32xf32>
    %324 = math.tanh %323 : vector<2x32xf32>
    %325 = arith.mulf %320, %324 : vector<2x32xf32>
    %cst_123 = arith.constant dense<0.000000e+00> : vector<2x8xf32>
    %326 = tpu.matmul %325, %6, %cst_123 {dimension_numbers = #tpu.dot_dimension_numbers<[1], [0], [0], [1], [0, 0, 1, 1], [], []>} : vector<2x32xf32>, vector<32x8xf32>, vector<2x8xf32> -> vector<2x8xf32>
    %327 = vector.broadcast %7 : vector<1x8xf32> to vector<2x8xf32>
    %328 = arith.addf %326, %327 : vector<2x8xf32>
    %329 = arith.index_cast %c6_i32 : i32 to index
    %c0_124 = arith.constant 0 : index
    %c0_125 = arith.constant 0 : index
    %330 = vector.load %arg8[%329, %c0_124, %c0_125] : memref<8x2x8xf32, #tpu.memory_space<vmem>>, vector<1x2x8xf32>
    %331 = vector.shape_cast %330 : vector<1x2x8xf32> to vector<2x8xf32>
    %332 = vector.shape_cast %328 : vector<2x8xf32> to vector<1x2x8xf32>
    tpu.vector_store %arg8[%329, %c0_124, %c0_125], %332 {strides = array<i32>} : memref<8x2x8xf32, #tpu.memory_space<vmem>>, vector<1x2x8xf32>,
    %c7_i32 = arith.constant 7 : i32
    %333 = arith.index_cast %c7_i32 : i32 to index
    %c0_126 = arith.constant 0 : index
    %c0_127 = arith.constant 0 : index
    %334 = vector.load %arg11[%333, %c0_126, %c0_127] : memref<8x2x128xf32, #tpu.memory_space<vmem>>, vector<1x2x128xf32>
    %335 = vector.shape_cast %334 : vector<1x2x128xf32> to vector<2x128xf32>
    %cst_128 = arith.constant dense<0.000000e+00> : vector<2x128xf32>
    %336 = tpu.matmul %325, %4, %cst_128 {dimension_numbers = #tpu.dot_dimension_numbers<[1], [0], [0], [1], [0, 0, 1, 1], [], []>} : vector<2x32xf32>, vector<32x128xf32>, vector<2x128xf32> -> vector<2x128xf32>
    %337 = arith.addf %335, %336 : vector<2x128xf32>
    %338 = vector.extract_strided_slice %337 {offsets = [0, 0], sizes = [2, 32], strides = [1, 1]} : vector<2x128xf32> to vector<2x32xf32>
    %339 = arith.negf %338 : vector<2x32xf32>
    %340 = math.exp %339 : vector<2x32xf32>
    %cst_129 = arith.constant 1.000000e+00 : f32
    %341 = vector.broadcast %cst_129 : f32 to vector<2x32xf32>
    %342 = arith.addf %341, %340 : vector<2x32xf32>
    %343 = arith.divf %341, %342 : vector<2x32xf32>
    %344 = vector.extract_strided_slice %337 {offsets = [0, 32], sizes = [2, 32], strides = [1, 1]} : vector<2x128xf32> to vector<2x32xf32>
    %345 = arith.negf %344 : vector<2x32xf32>
    %346 = math.exp %345 : vector<2x32xf32>
    %cst_130 = arith.constant 1.000000e+00 : f32
    %347 = vector.broadcast %cst_130 : f32 to vector<2x32xf32>
    %348 = arith.addf %347, %346 : vector<2x32xf32>
    %349 = arith.divf %347, %348 : vector<2x32xf32>
    %350 = vector.extract_strided_slice %337 {offsets = [0, 64], sizes = [2, 32], strides = [1, 1]} : vector<2x128xf32> to vector<2x32xf32>
    %351 = math.tanh %350 : vector<2x32xf32>
    %352 = vector.extract_strided_slice %337 {offsets = [0, 96], sizes = [2, 32], strides = [1, 1]} : vector<2x128xf32> to vector<2x32xf32>
    %353 = arith.negf %352 : vector<2x32xf32>
    %354 = math.exp %353 : vector<2x32xf32>
    %cst_131 = arith.constant 1.000000e+00 : f32
    %355 = vector.broadcast %cst_131 : f32 to vector<2x32xf32>
    %356 = arith.addf %355, %354 : vector<2x32xf32>
    %357 = arith.divf %355, %356 : vector<2x32xf32>
    %358 = arith.mulf %349, %323 : vector<2x32xf32>
    %359 = arith.mulf %343, %351 : vector<2x32xf32>
    %360 = arith.addf %358, %359 : vector<2x32xf32>
    %361 = math.tanh %360 : vector<2x32xf32>
    %362 = arith.mulf %357, %361 : vector<2x32xf32>
    %cst_132 = arith.constant dense<0.000000e+00> : vector<2x8xf32>
    %363 = tpu.matmul %362, %6, %cst_132 {dimension_numbers = #tpu.dot_dimension_numbers<[1], [0], [0], [1], [0, 0, 1, 1], [], []>} : vector<2x32xf32>, vector<32x8xf32>, vector<2x8xf32> -> vector<2x8xf32>
    %364 = vector.broadcast %7 : vector<1x8xf32> to vector<2x8xf32>
    %365 = arith.addf %363, %364 : vector<2x8xf32>
    %366 = arith.index_cast %c7_i32 : i32 to index
    %c0_133 = arith.constant 0 : index
    %c0_134 = arith.constant 0 : index
    %367 = vector.load %arg8[%366, %c0_133, %c0_134] : memref<8x2x8xf32, #tpu.memory_space<vmem>>, vector<1x2x8xf32>
    %368 = vector.shape_cast %367 : vector<1x2x8xf32> to vector<2x8xf32>
    %369 = vector.shape_cast %365 : vector<2x8xf32> to vector<1x2x8xf32>
    tpu.vector_store %arg8[%366, %c0_133, %c0_134], %369 {strides = array<i32>} : memref<8x2x8xf32, #tpu.memory_space<vmem>>, vector<1x2x8xf32>,
    %c8_i32 = arith.constant 8 : i32
    %c0_135 = arith.constant 0 : index
    %c0_136 = arith.constant 0 : index
    %370 = vector.load %arg9[%c0_135, %c0_136] : memref<2x32xf32, #tpu.memory_space<vmem>>, vector<2x32xf32>
    tpu.vector_store %arg9[%c0_135, %c0_136], %362 {strides = array<i32>} : memref<2x32xf32, #tpu.memory_space<vmem>>, vector<2x32xf32>,
    %c0_137 = arith.constant 0 : index
    %c0_138 = arith.constant 0 : index
    %371 = vector.load %arg10[%c0_137, %c0_138] : memref<2x32xf32, #tpu.memory_space<vmem>>, vector<2x32xf32>
    tpu.vector_store %arg10[%c0_137, %c0_138], %360 {strides = array<i32>} : memref<2x32xf32, #tpu.memory_space<vmem>>, vector<2x32xf32>,
    return
  }
  func.func @transform_0(%arg0: i32, %arg1: i32) -> (i32, i32, i32) {
    %c0_i32 = arith.constant 0 : i32
    %c0_i32_0 = arith.constant 0 : i32
    return %arg1, %arg0, %c0_i32 : i32, i32, i32
  }
  func.func @transform_1(%arg0: i32, %arg1: i32) -> (i32, i32) {
    %c0_i32 = arith.constant 0 : i32
    %c0_i32_0 = arith.constant 0 : i32
    %c0_i32_1 = arith.constant 0 : i32
    return %c0_i32, %c0_i32_0 : i32, i32
  }
  func.func @transform_2(%arg0: i32, %arg1: i32) -> (i32, i32) {
    %c0_i32 = arith.constant 0 : i32
    %c0_i32_0 = arith.constant 0 : i32
    %c0_i32_1 = arith.constant 0 : i32
    return %c0_i32, %c0_i32_0 : i32, i32
  }
  func.func @transform_3(%arg0: i32, %arg1: i32) -> (i32, i32) {
    %c0_i32 = arith.constant 0 : i32
    %c0_i32_0 = arith.constant 0 : i32
    %c0_i32_1 = arith.constant 0 : i32
    return %c0_i32, %c0_i32_0 : i32, i32
  }
  func.func @transform_4(%arg0: i32, %arg1: i32) -> (i32, i32) {
    %c0_i32 = arith.constant 0 : i32
    %c0_i32_0 = arith.constant 0 : i32
    %c0_i32_1 = arith.constant 0 : i32
    return %c0_i32, %c0_i32_0 : i32, i32
  }
  func.func @transform_5(%arg0: i32, %arg1: i32) -> (i32, i32) {
    %c0_i32 = arith.constant 0 : i32
    %c0_i32_0 = arith.constant 0 : i32
    %c0_i32_1 = arith.constant 0 : i32
    return %c0_i32, %c0_i32_0 : i32, i32
  }
  func.func @transform_6(%arg0: i32, %arg1: i32) -> (i32, i32, i32) {
    %c0_i32 = arith.constant 0 : i32
    %c0_i32_0 = arith.constant 0 : i32
    return %arg1, %arg0, %c0_i32 : i32, i32, i32
  }
}

</mosaic_0001>

<llo_original>
// kernel: tpu_custom_call.1
$region0: #{tpu_custom_call.1}
  #allocation0 [shape = 'u32[]', space=smem, size = 0x4, offset = 0x4, fixed_abs, tag = 'smem constant byte address 0x4 - core index']
  #allocation1 [shape = 'u32[144,128]{1,0:T(1,128)}', space=vmem, size = 0x12000, scoped, tag = 'internal scratch']
  #allocation2 [shape = 'f32[2,32]{1,0:T(2,128)}', space=vmem, size = 0x400, scoped, tag = 'scratch operand']
  #allocation3 [shape = 'f32[2,32]{1,0:T(2,128)}', space=vmem, size = 0x400, scoped, tag = 'scratch operand']
  #allocation4 [shape = 'f32[8,2,128]{2,1,0:T(2,128)}', space=vmem, size = 0x2000, scoped, tag = 'scratch operand']
  %s0 = inlined_call_operand.hbm [shape: f32[8,2,16], index: 0, kind: input, shape index: {}]
  %s1 = inlined_call_operand.hbm [shape: f32[16,128], index: 1, kind: input, shape index: {}]
  %s2 = inlined_call_operand.vmem [shape: f32[32,128], index: 2, kind: input, shape index: {}]
  %s3 = inlined_call_operand.vmem [shape: f32[1,128], index: 3, kind: input, shape index: {}]
  %s4 = inlined_call_operand.vmem [shape: f32[32,8], index: 4, kind: input, shape index: {}]
  %s5 = inlined_call_operand.vmem [shape: f32[1,8], index: 5, kind: input, shape index: {}]
  %s6 = inlined_call_operand.hbm [shape: f32[8,2,8], index: 6, kind: output, shape index: {}]
  %s7 = sld [smem:[#allocation0]]
  $region46: #{tpu_custom_call.1} parent=0
    _
  %s9 = ssub.s32 1, %s7
  %s10 = scalar_select 0, %s9, %s7
  $region1: #{tpu_custom_call.1} parent=0
    #allocation5 [shape = 'u8[8192]{0}', space=vmem, size = 0x2000, scoped, tag = 'input window, operand 0, single buffered']
    #allocation6 [shape = 's32[1]{0}', space=sflag, size = 0x4, scoped, tag = 'scoped memory for tpu_custom_call.1']
    #allocation7 [shape = 's32[1]{0}', space=sflag, size = 0x4, scoped, tag = 'scoped memory for tpu_custom_call.1']
    #allocation8 [shape = 'u8[8192]{0}', space=vmem, size = 0x2000, scoped, tag = 'input window, operand 1, single buffered']
    #allocation9 [shape = 's32[1]{0}', space=sflag, size = 0x4, scoped, tag = 'scoped memory for tpu_custom_call.1']
    #allocation10 [shape = 'u8[8192]{0}', space=vmem, size = 0x2000, scoped, tag = 'output window, operand 0, single buffered']
    %11 = vsyncpa [#allocation6], 0
    %12 = vsyncpa [#allocation9], 0
    %13 = vsyncpa [#allocation7], 0
    // Predicated region
    $region2: #{tpu_custom_call.1} parent=1 // pred_check
      _
    $region3: #{tpu_custom_call.1} parent=1 // pred_check_branch
      %15 = sbr.rel (0) target = $region5
    $region4: #{tpu_custom_call.1} parent=1 // pred_region
      %s17 = ssub.s32 256, 256
      %18 = vsyncadd [#allocation6], %s17
      %s19 = sshll.u32 [#allocation5], 4
      %s20 = int_to_ptr.vmem [resolvable:$true] %s19
      %25 = dma.hbm_to_vmem [thread:$0]  %s0, 256, %s20, [#allocation6], 32, 32, 2
    $region5: #{tpu_custom_call.1} parent=1 // pred_fallthru
      _
    // Predicated region
    $region6: #{tpu_custom_call.1} parent=1 // pred_check
      _
    $region7: #{tpu_custom_call.1} parent=1 // pred_check_branch
      %27 = sbr.rel (0) target = $region9
    $region8: #{tpu_custom_call.1} parent=1 // pred_region
      %s29 = ssub.s32 256, 256
      %30 = vsyncadd [#allocation9], %s29
      %s31 = sshll.u32 [#allocation8], 4
      %s32 = int_to_ptr.vmem [resolvable:$true] %s31
      %37 = dma.hbm_to_vmem [thread:$0]  %s1, 256, %s32, [#allocation9], 128, 128, 8
    $region9: #{tpu_custom_call.1} parent=1 // pred_fallthru
      _
    // Predicated region
    $region10: #{tpu_custom_call.1} parent=1 // pred_check
      _
    $region11: #{tpu_custom_call.1} parent=1 // pred_check_branch
      %39 = sbr.rel (0) target = $region13
    $region12: #{tpu_custom_call.1} parent=1 // pred_region
      _
    $region13: #{tpu_custom_call.1} parent=1 // pred_fallthru
      _
    // Predicated region
    $region14: #{tpu_custom_call.1} parent=1 // pred_check
      _
    $region15: #{tpu_custom_call.1} parent=1 // pred_check_branch
      %41 = sbr.rel (0) target = $region17
    $region16: #{tpu_custom_call.1} parent=1 // pred_region
      _
    $region17: #{tpu_custom_call.1} parent=1 // pred_fallthru
      _
    // Predicated region
    $region18: #{tpu_custom_call.1} parent=1 // pred_check
      _
    $region19: #{tpu_custom_call.1} parent=1 // pred_check_branch
      %43 = sbr.rel (0) target = $region21
    $region20: #{tpu_custom_call.1} parent=1 // pred_region
      _
    $region21: #{tpu_custom_call.1} parent=1 // pred_fallthru
      _
    // Predicated region
    $region22: #{tpu_custom_call.1} parent=1 // pred_check
      _
    $region23: #{tpu_custom_call.1} parent=1 // pred_check_branch
      %45 = sbr.rel (0) target = $region25
    $region24: #{tpu_custom_call.1} parent=1 // pred_region
      _
    $region25: #{tpu_custom_call.1} parent=1 // pred_fallthru
      _
    // Predicated region
    $region26: #{tpu_custom_call.1} parent=1 // pred_check
      _
    $region27: #{tpu_custom_call.1} parent=1 // pred_check_branch
      %47 = sbr.rel (0) target = $region29
    $region28: #{tpu_custom_call.1} parent=1 // pred_region
      %48 = dma.done [#allocation6], 256
    $region29: #{tpu_custom_call.1} parent=1 // pred_fallthru
      _
    // Predicated region
    $region30: #{tpu_custom_call.1} parent=1 // pred_check
      _
    $region31: #{tpu_custom_call.1} parent=1 // pred_check_branch
      %50 = sbr.rel (0) target = $region33
    $region32: #{tpu_custom_call.1} parent=1 // pred_region
      %51 = dma.done [#allocation9], 256
    $region33: #{tpu_custom_call.1} parent=1 // pred_fallthru
      _
    %p52 = scmp.eq.s32.totalorder 0, 0
    // Predicated region
    $region34: #{tpu_custom_call.1} parent=1 // pred_check
      %p53 = pneg %p52
    $region35: #{tpu_custom_call.1} parent=1 // pred_check_branch
      %55 = sbr.rel (%p53) target = $region37
    $region36: #{tpu_custom_call.1} parent=1 // pred_region
      %vm56 = vcmask 254976
      %57 = vst.msk [vmem:[#allocation2] sm:$0x3] %vm56, 0.0
      %58 = vst.msk [vmem:[#allocation3] sm:$0x3] %vm56, 0.0
    $region37: #{tpu_custom_call.1} parent=1 // pred_fallthru
      _
    %v59 = vld [vmem:[#allocation8] sm:$0xff]
    %v60 = vld [vmem:[#allocation8 + $0x8] sm:$0xff]
    %v61 = vld [vmem:[%s2] sm:$0xff]
    %v62 = vld [vmem:[%s2 + $0x8] sm:$0xff]
    %v63 = vld [vmem:[%s2 + $0x10] sm:$0xff]
    %v64 = vld [vmem:[%s2 + $0x18] sm:$0xff]
    %v65 = vld [vmem:[%s3] sm:$0x1]
    %v66 = vld [vmem:[%s4] sm:$0xff]
    %v67 = vld [vmem:[%s4 + $0x8] sm:$0xff]
    %v68 = vld [vmem:[%s4 + $0x10] sm:$0xff]
    %v69 = vld [vmem:[%s4 + $0x18] sm:$0xff]
    %v70 = vld [vmem:[%s5] sm:$0x1]
    %v71 = vld [vmem:[#allocation5] sm:$0x3]
    %v73 = vlaneseq
    %v74 = vshrl.u32 %v73, 7
    %v75 = vsub.s32 0, %v74
    %v76 = vrot.slane %v65, %v75
    %vm78 = vcmask 130048
    %v80 = vsel %vm78, %v71, 0
    %82 = vmatprep.subr.mxu0 0.0
    %83 = vmatpush1.msra.mxu0 0.0
    %84 = vmatprep.subr.mxu0 0.0
    %85 = vmatpush1.msra.mxu0 0.0
    %86 = vmatprep.subr.mxu0 0.0
    %87 = vmatpush1.msra.mxu0 0.0
    %88 = vmatprep.subr.mxu0 0.0
    %89 = vmatpush1.msra.mxu0 0.0
    %90 = vmatprep.subr.mxu0 0.0
    %91 = vmatpush1.msra.mxu0 0.0
    %92 = vmatprep.subr.mxu0 0.0
    %93 = vmatpush1.msra.mxu0 0.0
    %94 = vmatprep.subr.mxu0 0.0
    %95 = vmatpush1.msra.mxu0 0.0
    %96 = vmatprep.subr.mxu0 0.0
    %97 = vmatpush1.msra.mxu0 0.0
    %98 = vmatprep.subr.mxu0 0.0
    %99 = vmatpush1.msra.mxu0 0.0
    %100 = vmatprep.subr.mxu0 0.0
    %101 = vmatpush1.msra.mxu0 0.0
    %102 = vmatprep.subr.mxu0 0.0
    %103 = vmatpush1.msra.mxu0 0.0
    %104 = vmatprep.subr.mxu0 0.0
    %105 = vmatpush1.msra.mxu0 0.0
    %106 = vmatprep.subr.mxu0 0.0
    %107 = vmatpush1.msra.mxu0 0.0
    %108 = vmatprep.subr.mxu0 0.0
    %109 = vmatpush1.msra.mxu0 0.0
    %110 = vmatprep.subr.mxu0 0.0
    %111 = vmatpush1.msra.mxu0 %v60
    %112 = vmatprep.subr.mxu0 0.0
    %113 = vmatpush1.msra.mxu0 %v59
    %114 = vmatprep.subr.mxu0 0.0
    %115 = vmatpush2.msra.mxu0 0.0
    %116 = vmatprep.subr.mxu0 0.0
    %117 = vmatpush2.msra.mxu0 0.0
    %118 = vmatprep.subr.mxu0 0.0
    %119 = vmatpush2.msra.mxu0 0.0
    %120 = vmatprep.subr.mxu0 0.0
    %121 = vmatpush2.msra.mxu0 0.0
    %122 = vmatprep.subr.mxu0 0.0
    %123 = vmatpush2.msra.mxu0 0.0
    %124 = vmatprep.subr.mxu0 0.0
    %125 = vmatpush2.msra.mxu0 0.0
    %126 = vmatprep.subr.mxu0 0.0
    %127 = vmatpush2.msra.mxu0 0.0
    %128 = vmatprep.subr.mxu0 0.0
    %129 = vmatpush2.msra.mxu0 0.0
    %130 = vmatprep.subr.mxu0 0.0
    %131 = vmatpush2.msra.mxu0 0.0
    %132 = vmatprep.subr.mxu0 0.0
    %133 = vmatpush2.msra.mxu0 0.0
    %134 = vmatprep.subr.mxu0 0.0
    %135 = vmatpush2.msra.mxu0 0.0
    %136 = vmatprep.subr.mxu0 0.0
    %137 = vmatpush2.msra.mxu0 0.0
    %138 = vmatprep.subr.mxu0 0.0
    %139 = vmatpush2.msra.mxu0 0.0
    %140 = vmatprep.subr.mxu0 0.0
    %141 = vmatpush2.msra.mxu0 0.0
    %142 = vmatprep.subr.mxu0 0.0
    %143 = vmatpush2.msra.mxu0 0.0
    %144 = vmatprep.subr.mxu0 0.0
    %145 = vmatpush2.msra.mxu0 0.0
    %146 = vmatprep.mubr.f32.mxu0 0.0
    %147 = vmatmul.mubr.f32.gmra.mxu0 %v80
    %v148 = vpop.f32.mrf.mxu0
    %v149 = vadd.f32 %v76, %v148
    %v150 = vpop.f32.mrf.mxu0
    %151 = vdwg.mxu0
    %152 = vst [vmem:[#allocation4] sm:$0x3] %v149
    %s153 = scalar_lea.vmem [#allocation5], 2
    %v154 = vld [vmem:[%s153] sm:$0x3]
    %v156 = vsel %vm78, %v154, 0
    %158 = vmatprep.subr.mxu0 0.0
    %159 = vmatpush1.msra.mxu0 0.0
    %160 = vmatprep.subr.mxu0 0.0
    %161 = vmatpush1.msra.mxu0 0.0
    %162 = vmatprep.subr.mxu0 0.0
    %163 = vmatpush1.msra.mxu0 0.0
    %164 = vmatprep.subr.mxu0 0.0
    %165 = vmatpush1.msra.mxu0 0.0
    %166 = vmatprep.subr.mxu0 0.0
    %167 = vmatpush1.msra.mxu0 0.0
    %168 = vmatprep.subr.mxu0 0.0
    %169 = vmatpush1.msra.mxu0 0.0
    %170 = vmatprep.subr.mxu0 0.0
    %171 = vmatpush1.msra.mxu0 0.0
    %172 = vmatprep.subr.mxu0 0.0
    %173 = vmatpush1.msra.mxu0 0.0
    %174 = vmatprep.subr.mxu0 0.0
    %175 = vmatpush1.msra.mxu0 0.0
    %176 = vmatprep.subr.mxu0 0.0
    %177 = vmatpush1.msra.mxu0 0.0
    %178 = vmatprep.subr.mxu0 0.0
    %179 = vmatpush1.msra.mxu0 0.0
    %180 = vmatprep.subr.mxu0 0.0
    %181 = vmatpush1.msra.mxu0 0.0
    %182 = vmatprep.subr.mxu0 0.0
    %183 = vmatpush1.msra.mxu0 0.0
    %184 = vmatprep.subr.mxu0 0.0
    %185 = vmatpush1.msra.mxu0 0.0
    %186 = vmatprep.subr.mxu0 0.0
    %187 = vmatpush1.msra.mxu0 %v60
    %188 = vmatprep.subr.mxu0 0.0
    %189 = vmatpush1.msra.mxu0 %v59
    %190 = vmatprep.subr.mxu0 0.0
    %191 = vmatpush2.msra.mxu0 0.0
    %192 = vmatprep.subr.mxu0 0.0
    %193 = vmatpush2.msra.mxu0 0.0
    %194 = vmatprep.subr.mxu0 0.0
    %195 = vmatpush2.msra.mxu0 0.0
    %196 = vmatprep.subr.mxu0 0.0
    %197 = vmatpush2.msra.mxu0 0.0
    %198 = vmatprep.subr.mxu0 0.0
    %199 = vmatpush2.msra.mxu0 0.0
    %200 = vmatprep.subr.mxu0 0.0
    %201 = vmatpush2.msra.mxu0 0.0
    %202 = vmatprep.subr.mxu0 0.0
    %203 = vmatpush2.msra.mxu0 0.0
    %204 = vmatprep.subr.mxu0 0.0
    %205 = vmatpush2.msra.mxu0 0.0
    %206 = vmatprep.subr.mxu0 0.0
    %207 = vmatpush2.msra.mxu0 0.0
    %208 = vmatprep.subr.mxu0 0.0
    %209 = vmatpush2.msra.mxu0 0.0
    %210 = vmatprep.subr.mxu0 0.0
    %211 = vmatpush2.msra.mxu0 0.0
    %212 = vmatprep.subr.mxu0 0.0
    %213 = vmatpush2.msra.mxu0 0.0
    %214 = vmatprep.subr.mxu0 0.0
    %215 = vmatpush2.msra.mxu0 0.0
    %216 = vmatprep.subr.mxu0 0.0
    %217 = vmatpush2.msra.mxu0 0.0
    %218 = vmatprep.subr.mxu0 0.0
    %219 = vmatpush2.msra.mxu0 0.0
    %220 = vmatprep.subr.mxu0 0.0
    %221 = vmatpush2.msra.mxu0 0.0
    %222 = vmatprep.mubr.f32.mxu0 0.0
    %223 = vmatmul.mubr.f32.gmra.mxu0 %v156
    %v224 = vpop.f32.mrf.mxu0
    %v225 = vadd.f32 %v76, %v224
    %v226 = vpop.f32.mrf.mxu0
    %227 = vdwg.mxu0
    %s228 = scalar_lea.vmem [#allocation4], 2
    %229 = vst [vmem:[%s228] sm:$0x3] %v225
    %s230 = scalar_lea.vmem [#allocation5], 4
    %v231 = vld [vmem:[%s230] sm:$0x3]
    %v233 = vsel %vm78, %v231, 0
    %235 = vmatprep.subr.mxu0 0.0
    %236 = vmatpush1.msra.mxu0 0.0
    %237 = vmatprep.subr.mxu0 0.0
    %238 = vmatpush1.msra.mxu0 0.0
    %239 = vmatprep.subr.mxu0 0.0
    %240 = vmatpush1.msra.mxu0 0.0
    %241 = vmatprep.subr.mxu0 0.0
    %242 = vmatpush1.msra.mxu0 0.0
    %243 = vmatprep.subr.mxu0 0.0
    %244 = vmatpush1.msra.mxu0 0.0
    %245 = vmatprep.subr.mxu0 0.0
    %246 = vmatpush1.msra.mxu0 0.0
    %247 = vmatprep.subr.mxu0 0.0
    %248 = vmatpush1.msra.mxu0 0.0
    %249 = vmatprep.subr.mxu0 0.0
    %250 = vmatpush1.msra.mxu0 0.0
    %251 = vmatprep.subr.mxu0 0.0
    %252 = vmatpush1.msra.mxu0 0.0
    %253 = vmatprep.subr.mxu0 0.0
    %254 = vmatpush1.msra.mxu0 0.0
    %255 = vmatprep.subr.mxu0 0.0
    %256 = vmatpush1.msra.mxu0 0.0
    %257 = vmatprep.subr.mxu0 0.0
    %258 = vmatpush1.msra.mxu0 0.0
    %259 = vmatprep.subr.mxu0 0.0
    %260 = vmatpush1.msra.mxu0 0.0
    %261 = vmatprep.subr.mxu0 0.0
    %262 = vmatpush1.msra.mxu0 0.0
    %263 = vmatprep.subr.mxu0 0.0
    %264 = vmatpush1.msra.mxu0 %v60
    %265 = vmatprep.subr.mxu0 0.0
    %266 = vmatpush1.msra.mxu0 %v59
    %267 = vmatprep.subr.mxu0 0.0
    %268 = vmatpush2.msra.mxu0 0.0
    %269 = vmatprep.subr.mxu0 0.0
    %270 = vmatpush2.msra.mxu0 0.0
    %271 = vmatprep.subr.mxu0 0.0
    %272 = vmatpush2.msra.mxu0 0.0
    %273 = vmatprep.subr.mxu0 0.0
    %274 = vmatpush2.msra.mxu0 0.0
    %275 = vmatprep.subr.mxu0 0.0
    %276 = vmatpush2.msra.mxu0 0.0
    %277 = vmatprep.subr.mxu0 0.0
    %278 = vmatpush2.msra.mxu0 0.0
    %279 = vmatprep.subr.mxu0 0.0
    %280 = vmatpush2.msra.mxu0 0.0
    %281 = vmatprep.subr.mxu0 0.0
    %282 = vmatpush2.msra.mxu0 0.0
    %283 = vmatprep.subr.mxu0 0.0
    %284 = vmatpush2.msra.mxu0 0.0
    %285 = vmatprep.subr.mxu0 0.0
    %286 = vmatpush2.msra.mxu0 0.0
    %287 = vmatprep.subr.mxu0 0.0
    %288 = vmatpush2.msra.mxu0 0.0
    %289 = vmatprep.subr.mxu0 0.0
    %290 = vmatpush2.msra.mxu0 0.0
    %291 = vmatprep.subr.mxu0 0.0
    %292 = vmatpush2.msra.mxu0 0.0
    %293 = vmatprep.subr.mxu0 0.0
    %294 = vmatpush2.msra.mxu0 0.0
    %295 = vmatprep.subr.mxu0 0.0
    %296 = vmatpush2.msra.mxu0 0.0
    %297 = vmatprep.subr.mxu0 0.0
    %298 = vmatpush2.msra.mxu0 0.0
    %299 = vmatprep.mubr.f32.mxu0 0.0
    %300 = vmatmul.mubr.f32.gmra.mxu0 %v233
    %v301 = vpop.f32.mrf.mxu0
    %v302 = vadd.f32 %v76, %v301
    %v303 = vpop.f32.mrf.mxu0
    %304 = vdwg.mxu0
    %s305 = scalar_lea.vmem [#allocation4], 4
    %306 = vst [vmem:[%s305] sm:$0x3] %v302
    %s307 = scalar_lea.vmem [#allocation5], 6
    %v308 = vld [vmem:[%s307] sm:$0x3]
    %v310 = vsel %vm78, %v308, 0
    %312 = vmatprep.subr.mxu0 0.0
    %313 = vmatpush1.msra.mxu0 0.0
    %314 = vmatprep.subr.mxu0 0.0
    %315 = vmatpush1.msra.mxu0 0.0
    %316 = vmatprep.subr.mxu0 0.0
    %317 = vmatpush1.msra.mxu0 0.0
    %318 = vmatprep.subr.mxu0 0.0
    %319 = vmatpush1.msra.mxu0 0.0
    %320 = vmatprep.subr.mxu0 0.0
    %321 = vmatpush1.msra.mxu0 0.0
    %322 = vmatprep.subr.mxu0 0.0
    %323 = vmatpush1.msra.mxu0 0.0
    %324 = vmatprep.subr.mxu0 0.0
    %325 = vmatpush1.msra.mxu0 0.0
    %326 = vmatprep.subr.mxu0 0.0
    %327 = vmatpush1.msra.mxu0 0.0
    %328 = vmatprep.subr.mxu0 0.0
    %329 = vmatpush1.msra.mxu0 0.0
    %330 = vmatprep.subr.mxu0 0.0
    %331 = vmatpush1.msra.mxu0 0.0
    %332 = vmatprep.subr.mxu0 0.0
    %333 = vmatpush1.msra.mxu0 0.0
    %334 = vmatprep.subr.mxu0 0.0
    %335 = vmatpush1.msra.mxu0 0.0
    %336 = vmatprep.subr.mxu0 0.0
    %337 = vmatpush1.msra.mxu0 0.0
    %338 = vmatprep.subr.mxu0 0.0
    %339 = vmatpush1.msra.mxu0 0.0
    %340 = vmatprep.subr.mxu0 0.0
    %341 = vmatpush1.msra.mxu0 %v60
    %342 = vmatprep.subr.mxu0 0.0
    %343 = vmatpush1.msra.mxu0 %v59
    %344 = vmatprep.subr.mxu0 0.0
    %345 = vmatpush2.msra.mxu0 0.0
    %346 = vmatprep.subr.mxu0 0.0
    %347 = vmatpush2.msra.mxu0 0.0
    %348 = vmatprep.subr.mxu0 0.0
    %349 = vmatpush2.msra.mxu0 0.0
    %350 = vmatprep.subr.mxu0 0.0
    %351 = vmatpush2.msra.mxu0 0.0
    %352 = vmatprep.subr.mxu0 0.0
    %353 = vmatpush2.msra.mxu0 0.0
    %354 = vmatprep.subr.mxu0 0.0
    %355 = vmatpush2.msra.mxu0 0.0
    %356 = vmatprep.subr.mxu0 0.0
    %357 = vmatpush2.msra.mxu0 0.0
    %358 = vmatprep.subr.mxu0 0.0
    %359 = vmatpush2.msra.mxu0 0.0
    %360 = vmatprep.subr.mxu0 0.0
    %361 = vmatpush2.msra.mxu0 0.0
    %362 = vmatprep.subr.mxu0 0.0
    %363 = vmatpush2.msra.mxu0 0.0
    %364 = vmatprep.subr.mxu0 0.0
    %365 = vmatpush2.msra.mxu0 0.0
    %366 = vmatprep.subr.mxu0 0.0
    %367 = vmatpush2.msra.mxu0 0.0
    %368 = vmatprep.subr.mxu0 0.0
    %369 = vmatpush2.msra.mxu0 0.0
    %370 = vmatprep.subr.mxu0 0.0
    %371 = vmatpush2.msra.mxu0 0.0
    %372 = vmatprep.subr.mxu0 0.0
    %373 = vmatpush2.msra.mxu0 0.0
    %374 = vmatprep.subr.mxu0 0.0
    %375 = vmatpush2.msra.mxu0 0.0
    %376 = vmatprep.mubr.f32.mxu0 0.0
    %377 = vmatmul.mubr.f32.gmra.mxu0 %v310
    %v378 = vpop.f32.mrf.mxu0
    %v379 = vadd.f32 %v76, %v378
    %v380 = vpop.f32.mrf.mxu0
    %381 = vdwg.mxu0
    %s382 = scalar_lea.vmem [#allocation4], 6
    %383 = vst [vmem:[%s382] sm:$0x3] %v379
    %s384 = scalar_lea.vmem [#allocation5], 8
    %v385 = vld [vmem:[%s384] sm:$0x3]
    %v387 = vsel %vm78, %v385, 0
    %389 = vmatprep.subr.mxu0 0.0
    %390 = vmatpush1.msra.mxu0 0.0
    %391 = vmatprep.subr.mxu0 0.0
    %392 = vmatpush1.msra.mxu0 0.0
    %393 = vmatprep.subr.mxu0 0.0
    %394 = vmatpush1.msra.mxu0 0.0
    %395 = vmatprep.subr.mxu0 0.0
    %396 = vmatpush1.msra.mxu0 0.0
    %397 = vmatprep.subr.mxu0 0.0
    %398 = vmatpush1.msra.mxu0 0.0
    %399 = vmatprep.subr.mxu0 0.0
    %400 = vmatpush1.msra.mxu0 0.0
    %401 = vmatprep.subr.mxu0 0.0
    %402 = vmatpush1.msra.mxu0 0.0
    %403 = vmatprep.subr.mxu0 0.0
    %404 = vmatpush1.msra.mxu0 0.0
    %405 = vmatprep.subr.mxu0 0.0
    %406 = vmatpush1.msra.mxu0 0.0
    %407 = vmatprep.subr.mxu0 0.0
    %408 = vmatpush1.msra.mxu0 0.0
    %409 = vmatprep.subr.mxu0 0.0
    %410 = vmatpush1.msra.mxu0 0.0
    %411 = vmatprep.subr.mxu0 0.0
    %412 = vmatpush1.msra.mxu0 0.0
    %413 = vmatprep.subr.mxu0 0.0
    %414 = vmatpush1.msra.mxu0 0.0
    %415 = vmatprep.subr.mxu0 0.0
    %416 = vmatpush1.msra.mxu0 0.0
    %417 = vmatprep.subr.mxu0 0.0
    %418 = vmatpush1.msra.mxu0 %v60
    %419 = vmatprep.subr.mxu0 0.0
    %420 = vmatpush1.msra.mxu0 %v59
    %421 = vmatprep.subr.mxu0 0.0
    %422 = vmatpush2.msra.mxu0 0.0
    %423 = vmatprep.subr.mxu0 0.0
    %424 = vmatpush2.msra.mxu0 0.0
    %425 = vmatprep.subr.mxu0 0.0
    %426 = vmatpush2.msra.mxu0 0.0
    %427 = vmatprep.subr.mxu0 0.0
    %428 = vmatpush2.msra.mxu0 0.0
    %429 = vmatprep.subr.mxu0 0.0
    %430 = vmatpush2.msra.mxu0 0.0
    %431 = vmatprep.subr.mxu0 0.0
    %432 = vmatpush2.msra.mxu0 0.0
    %433 = vmatprep.subr.mxu0 0.0
    %434 = vmatpush2.msra.mxu0 0.0
    %435 = vmatprep.subr.mxu0 0.0
    %436 = vmatpush2.msra.mxu0 0.0
    %437 = vmatprep.subr.mxu0 0.0
    %438 = vmatpush2.msra.mxu0 0.0
    %439 = vmatprep.subr.mxu0 0.0
    %440 = vmatpush2.msra.mxu0 0.0
    %441 = vmatprep.subr.mxu0 0.0
    %442 = vmatpush2.msra.mxu0 0.0
    %443 = vmatprep.subr.mxu0 0.0
    %444 = vmatpush2.msra.mxu0 0.0
    %445 = vmatprep.subr.mxu0 0.0
    %446 = vmatpush2.msra.mxu0 0.0
    %447 = vmatprep.subr.mxu0 0.0
    %448 = vmatpush2.msra.mxu0 0.0
    %449 = vmatprep.subr.mxu0 0.0
    %450 = vmatpush2.msra.mxu0 0.0
    %451 = vmatprep.subr.mxu0 0.0
    %452 = vmatpush2.msra.mxu0 0.0
    %453 = vmatprep.mubr.f32.mxu0 0.0
    %454 = vmatmul.mubr.f32.gmra.mxu0 %v387
    %v455 = vpop.f32.mrf.mxu0
    %v456 = vadd.f32 %v76, %v455
    %v457 = vpop.f32.mrf.mxu0
    %458 = vdwg.mxu0
    %s459 = scalar_lea.vmem [#allocation4], 8
    %460 = vst [vmem:[%s459] sm:$0x3] %v456
    %s461 = scalar_lea.vmem [#allocation5], 10
    %v462 = vld [vmem:[%s461] sm:$0x3]
    %v464 = vsel %vm78, %v462, 0
    %466 = vmatprep.subr.mxu0 0.0
    %467 = vmatpush1.msra.mxu0 0.0
    %468 = vmatprep.subr.mxu0 0.0
    %469 = vmatpush1.msra.mxu0 0.0
    %470 = vmatprep.subr.mxu0 0.0
    %471 = vmatpush1.msra.mxu0 0.0
    %472 = vmatprep.subr.mxu0 0.0
    %473 = vmatpush1.msra.mxu0 0.0
    %474 = vmatprep.subr.mxu0 0.0
    %475 = vmatpush1.msra.mxu0 0.0
    %476 = vmatprep.subr.mxu0 0.0
    %477 = vmatpush1.msra.mxu0 0.0
    %478 = vmatprep.subr.mxu0 0.0
    %479 = vmatpush1.msra.mxu0 0.0
    %480 = vmatprep.subr.mxu0 0.0
    %481 = vmatpush1.msra.mxu0 0.0
    %482 = vmatprep.subr.mxu0 0.0
    %483 = vmatpush1.msra.mxu0 0.0
    %484 = vmatprep.subr.mxu0 0.0
    %485 = vmatpush1.msra.mxu0 0.0
    %486 = vmatprep.subr.mxu0 0.0
    %487 = vmatpush1.msra.mxu0 0.0
    %488 = vmatprep.subr.mxu0 0.0
    %489 = vmatpush1.msra.mxu0 0.0
    %490 = vmatprep.subr.mxu0 0.0
    %491 = vmatpush1.msra.mxu0 0.0
    %492 = vmatprep.subr.mxu0 0.0
    %493 = vmatpush1.msra.mxu0 0.0
    %494 = vmatprep.subr.mxu0 0.0
    %495 = vmatpush1.msra.mxu0 %v60
    %496 = vmatprep.subr.mxu0 0.0
    %497 = vmatpush1.msra.mxu0 %v59
    %498 = vmatprep.subr.mxu0 0.0
    %499 = vmatpush2.msra.mxu0 0.0
    %500 = vmatprep.subr.mxu0 0.0
    %501 = vmatpush2.msra.mxu0 0.0
    %502 = vmatprep.subr.mxu0 0.0
    %503 = vmatpush2.msra.mxu0 0.0
    %504 = vmatprep.subr.mxu0 0.0
    %505 = vmatpush2.msra.mxu0 0.0
    %506 = vmatprep.subr.mxu0 0.0
    %507 = vmatpush2.msra.mxu0 0.0
    %508 = vmatprep.subr.mxu0 0.0
    %509 = vmatpush2.msra.mxu0 0.0
    %510 = vmatprep.subr.mxu0 0.0
    %511 = vmatpush2.msra.mxu0 0.0
    %512 = vmatprep.subr.mxu0 0.0
    %513 = vmatpush2.msra.mxu0 0.0
    %514 = vmatprep.subr.mxu0 0.0
    %515 = vmatpush2.msra.mxu0 0.0
    %516 = vmatprep.subr.mxu0 0.0
    %517 = vmatpush2.msra.mxu0 0.0
    %518 = vmatprep.subr.mxu0 0.0
    %519 = vmatpush2.msra.mxu0 0.0
    %520 = vmatprep.subr.mxu0 0.0
    %521 = vmatpush2.msra.mxu0 0.0
    %522 = vmatprep.subr.mxu0 0.0
    %523 = vmatpush2.msra.mxu0 0.0
    %524 = vmatprep.subr.mxu0 0.0
    %525 = vmatpush2.msra.mxu0 0.0
    %526 = vmatprep.subr.mxu0 0.0
    %527 = vmatpush2.msra.mxu0 0.0
    %528 = vmatprep.subr.mxu0 0.0
    %529 = vmatpush2.msra.mxu0 0.0
    %530 = vmatprep.mubr.f32.mxu0 0.0
    %531 = vmatmul.mubr.f32.gmra.mxu0 %v464
    %v532 = vpop.f32.mrf.mxu0
    %v533 = vadd.f32 %v76, %v532
    %v534 = vpop.f32.mrf.mxu0
    %535 = vdwg.mxu0
    %s536 = scalar_lea.vmem [#allocation4], 10
    %537 = vst [vmem:[%s536] sm:$0x3] %v533
    %s538 = scalar_lea.vmem [#allocation5], 12
    %v539 = vld [vmem:[%s538] sm:$0x3]
    %v541 = vsel %vm78, %v539, 0
    %543 = vmatprep.subr.mxu0 0.0
    %544 = vmatpush1.msra.mxu0 0.0
    %545 = vmatprep.subr.mxu0 0.0
    %546 = vmatpush1.msra.mxu0 0.0
    %547 = vmatprep.subr.mxu0 0.0
    %548 = vmatpush1.msra.mxu0 0.0
    %549 = vmatprep.subr.mxu0 0.0
    %550 = vmatpush1.msra.mxu0 0.0
    %551 = vmatprep.subr.mxu0 0.0
    %552 = vmatpush1.msra.mxu0 0.0
    %553 = vmatprep.subr.mxu0 0.0
    %554 = vmatpush1.msra.mxu0 0.0
    %555 = vmatprep.subr.mxu0 0.0
    %556 = vmatpush1.msra.mxu0 0.0
    %557 = vmatprep.subr.mxu0 0.0
    %558 = vmatpush1.msra.mxu0 0.0
    %559 = vmatprep.subr.mxu0 0.0
    %560 = vmatpush1.msra.mxu0 0.0
    %561 = vmatprep.subr.mxu0 0.0
    %562 = vmatpush1.msra.mxu0 0.0
    %563 = vmatprep.subr.mxu0 0.0
    %564 = vmatpush1.msra.mxu0 0.0
    %565 = vmatprep.subr.mxu0 0.0
    %566 = vmatpush1.msra.mxu0 0.0
    %567 = vmatprep.subr.mxu0 0.0
    %568 = vmatpush1.msra.mxu0 0.0
    %569 = vmatprep.subr.mxu0 0.0
    %570 = vmatpush1.msra.mxu0 0.0
    %571 = vmatprep.subr.mxu0 0.0
    %572 = vmatpush1.msra.mxu0 %v60
    %573 = vmatprep.subr.mxu0 0.0
    %574 = vmatpush1.msra.mxu0 %v59
    %575 = vmatprep.subr.mxu0 0.0
    %576 = vmatpush2.msra.mxu0 0.0
    %577 = vmatprep.subr.mxu0 0.0
    %578 = vmatpush2.msra.mxu0 0.0
    %579 = vmatprep.subr.mxu0 0.0
    %580 = vmatpush2.msra.mxu0 0.0
    %581 = vmatprep.subr.mxu0 0.0
    %582 = vmatpush2.msra.mxu0 0.0
    %583 = vmatprep.subr.mxu0 0.0
    %584 = vmatpush2.msra.mxu0 0.0
    %585 = vmatprep.subr.mxu0 0.0
    %586 = vmatpush2.msra.mxu0 0.0
    %587 = vmatprep.subr.mxu0 0.0
    %588 = vmatpush2.msra.mxu0 0.0
    %589 = vmatprep.subr.mxu0 0.0
    %590 = vmatpush2.msra.mxu0 0.0
    %591 = vmatprep.subr.mxu0 0.0
    %592 = vmatpush2.msra.mxu0 0.0
    %593 = vmatprep.subr.mxu0 0.0
    %594 = vmatpush2.msra.mxu0 0.0
    %595 = vmatprep.subr.mxu0 0.0
    %596 = vmatpush2.msra.mxu0 0.0
    %597 = vmatprep.subr.mxu0 0.0
    %598 = vmatpush2.msra.mxu0 0.0
    %599 = vmatprep.subr.mxu0 0.0
    %600 = vmatpush2.msra.mxu0 0.0
    %601 = vmatprep.subr.mxu0 0.0
    %602 = vmatpush2.msra.mxu0 0.0
    %603 = vmatprep.subr.mxu0 0.0
    %604 = vmatpush2.msra.mxu0 0.0
    %605 = vmatprep.subr.mxu0 0.0
    %606 = vmatpush2.msra.mxu0 0.0
    %607 = vmatprep.mubr.f32.mxu0 0.0
    %608 = vmatmul.mubr.f32.gmra.mxu0 %v541
    %v609 = vpop.f32.mrf.mxu0
    %v610 = vadd.f32 %v76, %v609
    %v611 = vpop.f32.mrf.mxu0
    %612 = vdwg.mxu0
    %s613 = scalar_lea.vmem [#allocation4], 12
    %614 = vst [vmem:[%s613] sm:$0x3] %v610
    %s615 = scalar_lea.vmem [#allocation5], 14
    %v616 = vld [vmem:[%s615] sm:$0x3]
    %v618 = vsel %vm78, %v616, 0
    %620 = vmatprep.subr.mxu0 0.0
    %621 = vmatpush1.msra.mxu0 0.0
    %622 = vmatprep.subr.mxu0 0.0
    %623 = vmatpush1.msra.mxu0 0.0
    %624 = vmatprep.subr.mxu0 0.0
    %625 = vmatpush1.msra.mxu0 0.0
    %626 = vmatprep.subr.mxu0 0.0
    %627 = vmatpush1.msra.mxu0 0.0
    %628 = vmatprep.subr.mxu0 0.0
    %629 = vmatpush1.msra.mxu0 0.0
    %630 = vmatprep.subr.mxu0 0.0
    %631 = vmatpush1.msra.mxu0 0.0
    %632 = vmatprep.subr.mxu0 0.0
    %633 = vmatpush1.msra.mxu0 0.0
    %634 = vmatprep.subr.mxu0 0.0
    %635 = vmatpush1.msra.mxu0 0.0
    %636 = vmatprep.subr.mxu0 0.0
    %637 = vmatpush1.msra.mxu0 0.0
    %638 = vmatprep.subr.mxu0 0.0
    %639 = vmatpush1.msra.mxu0 0.0
    %640 = vmatprep.subr.mxu0 0.0
    %641 = vmatpush1.msra.mxu0 0.0
    %642 = vmatprep.subr.mxu0 0.0
    %643 = vmatpush1.msra.mxu0 0.0
    %644 = vmatprep.subr.mxu0 0.0
    %645 = vmatpush1.msra.mxu0 0.0
    %646 = vmatprep.subr.mxu0 0.0
    %647 = vmatpush1.msra.mxu0 0.0
    %648 = vmatprep.subr.mxu0 0.0
    %649 = vmatpush1.msra.mxu0 %v60
    %650 = vmatprep.subr.mxu0 0.0
    %651 = vmatpush1.msra.mxu0 %v59
    %652 = vmatprep.subr.mxu0 0.0
    %653 = vmatpush2.msra.mxu0 0.0
    %654 = vmatprep.subr.mxu0 0.0
    %655 = vmatpush2.msra.mxu0 0.0
    %656 = vmatprep.subr.mxu0 0.0
    %657 = vmatpush2.msra.mxu0 0.0
    %658 = vmatprep.subr.mxu0 0.0
    %659 = vmatpush2.msra.mxu0 0.0
    %660 = vmatprep.subr.mxu0 0.0
    %661 = vmatpush2.msra.mxu0 0.0
    %662 = vmatprep.subr.mxu0 0.0
    %663 = vmatpush2.msra.mxu0 0.0
    %664 = vmatprep.subr.mxu0 0.0
    %665 = vmatpush2.msra.mxu0 0.0
    %666 = vmatprep.subr.mxu0 0.0
    %667 = vmatpush2.msra.mxu0 0.0
    %668 = vmatprep.subr.mxu0 0.0
    %669 = vmatpush2.msra.mxu0 0.0
    %670 = vmatprep.subr.mxu0 0.0
    %671 = vmatpush2.msra.mxu0 0.0
    %672 = vmatprep.subr.mxu0 0.0
    %673 = vmatpush2.msra.mxu0 0.0
    %674 = vmatprep.subr.mxu0 0.0
    %675 = vmatpush2.msra.mxu0 0.0
    %676 = vmatprep.subr.mxu0 0.0
    %677 = vmatpush2.msra.mxu0 0.0
    %678 = vmatprep.subr.mxu0 0.0
    %679 = vmatpush2.msra.mxu0 0.0
    %680 = vmatprep.subr.mxu0 0.0
    %681 = vmatpush2.msra.mxu0 0.0
    %682 = vmatprep.subr.mxu0 0.0
    %683 = vmatpush2.msra.mxu0 0.0
    %684 = vmatprep.mubr.f32.mxu0 0.0
    %685 = vmatmul.mubr.f32.gmra.mxu0 %v618
    %v686 = vpop.f32.mrf.mxu0
    %v687 = vadd.f32 %v76, %v686
    %v688 = vpop.f32.mrf.mxu0
    %689 = vdwg.mxu0
    %s690 = scalar_lea.vmem [#allocation4], 14
    %691 = vst [vmem:[%s690] sm:$0x3] %v687
    %v692 = vld [vmem:[#allocation2] sm:$0x3]
    %v693 = vld [vmem:[#allocation3] sm:$0x3]
    %v694 = vld [vmem:[#allocation4] sm:$0x3]
    %vm695 = vcmask 261120
    %v697 = vsel %vm695, %v692, 0
    %699 = vmatprep.subr.mxu0 0.0
    %700 = vmatpush1.msra.mxu0 0.0
    %701 = vmatprep.subr.mxu0 0.0
    %702 = vmatpush1.msra.mxu0 0.0
    %703 = vmatprep.subr.mxu0 0.0
    %704 = vmatpush1.msra.mxu0 0.0
    %705 = vmatprep.subr.mxu0 0.0
    %706 = vmatpush1.msra.mxu0 0.0
    %707 = vmatprep.subr.mxu0 0.0
    %708 = vmatpush1.msra.mxu0 0.0
    %709 = vmatprep.subr.mxu0 0.0
    %710 = vmatpush1.msra.mxu0 0.0
    %711 = vmatprep.subr.mxu0 0.0
    %712 = vmatpush1.msra.mxu0 0.0
    %713 = vmatprep.subr.mxu0 0.0
    %714 = vmatpush1.msra.mxu0 0.0
    %715 = vmatprep.subr.mxu0 0.0
    %716 = vmatpush1.msra.mxu0 0.0
    %717 = vmatprep.subr.mxu0 0.0
    %718 = vmatpush1.msra.mxu0 0.0
    %719 = vmatprep.subr.mxu0 0.0
    %720 = vmatpush1.msra.mxu0 0.0
    %721 = vmatprep.subr.mxu0 0.0
    %722 = vmatpush1.msra.mxu0 0.0
    %723 = vmatprep.subr.mxu0 0.0
    %724 = vmatpush1.msra.mxu0 %v64
    %725 = vmatprep.subr.mxu0 0.0
    %726 = vmatpush1.msra.mxu0 %v63
    %727 = vmatprep.subr.mxu0 0.0
    %728 = vmatpush1.msra.mxu0 %v62
    %729 = vmatprep.subr.mxu0 0.0
    %730 = vmatpush1.msra.mxu0 %v61
    %731 = vmatprep.subr.mxu0 0.0
    %732 = vmatpush2.msra.mxu0 0.0
    %733 = vmatprep.subr.mxu0 0.0
    %734 = vmatpush2.msra.mxu0 0.0
    %735 = vmatprep.subr.mxu0 0.0
    %736 = vmatpush2.msra.mxu0 0.0
    %737 = vmatprep.subr.mxu0 0.0
    %738 = vmatpush2.msra.mxu0 0.0
    %739 = vmatprep.subr.mxu0 0.0
    %740 = vmatpush2.msra.mxu0 0.0
    %741 = vmatprep.subr.mxu0 0.0
    %742 = vmatpush2.msra.mxu0 0.0
    %743 = vmatprep.subr.mxu0 0.0
    %744 = vmatpush2.msra.mxu0 0.0
    %745 = vmatprep.subr.mxu0 0.0
    %746 = vmatpush2.msra.mxu0 0.0
    %747 = vmatprep.subr.mxu0 0.0
    %748 = vmatpush2.msra.mxu0 0.0
    %749 = vmatprep.subr.mxu0 0.0
    %750 = vmatpush2.msra.mxu0 0.0
    %751 = vmatprep.subr.mxu0 0.0
    %752 = vmatpush2.msra.mxu0 0.0
    %753 = vmatprep.subr.mxu0 0.0
    %754 = vmatpush2.msra.mxu0 0.0
    %755 = vmatprep.subr.mxu0 0.0
    %756 = vmatpush2.msra.mxu0 0.0
    %757 = vmatprep.subr.mxu0 0.0
    %758 = vmatpush2.msra.mxu0 0.0
    %759 = vmatprep.subr.mxu0 0.0
    %760 = vmatpush2.msra.mxu0 0.0
    %761 = vmatprep.subr.mxu0 0.0
    %762 = vmatpush2.msra.mxu0 0.0
    %763 = vmatprep.mubr.f32.mxu0 0.0
    %764 = vmatmul.mubr.f32.gmra.mxu0 %v697
    %v765 = vpop.f32.mrf.mxu0
    %v766 = vadd.f32 0.0, %v765
    %v767 = vpop.f32.mrf.mxu0
    %768 = vdwg.mxu0
    %v769 = vadd.f32 %v694, %v766
    %v770 = vxor.u32 %v769, 2147483648
    %v771 = vmul.f32 %v770, 1.442695
    %v772 = vpow.pop %v771
    %v773 = vadd.f32 %v772, 1.0
    %v774 = vrcp.pop %v773
    %v775 = vmul.f32 1.0, %v774
    %v776 = vtanh.pop %v769
    %778 = vrot.lane.b32.xlu0 %v693, 32
    %v779 = vpop.permute.xlu0 %778
    %v781 = vmul.f32 %v775, %v779
    %783 = vrot.lane.b32.xlu0 %v776, 64
    %v784 = vpop.permute.xlu0 %783
    %v786 = vmul.f32 %v775, %v784
    %788 = vrot.lane.b32.xlu0 %v786, 32
    %v789 = vpop.permute.xlu0 %788
    %v791 = vadd.f32 %v781, %v789
    %v792 = vtanh.pop %v791
    %794 = vrot.lane.b32.xlu0 %v792, 64
    %v795 = vpop.permute.xlu0 %794
    %v797 = vmul.f32 %v775, %v795
    %v799 = vlaneseq
    %v800 = vshrl.u32 %v799, 7
    %v801 = vsub.s32 0, %v800
    %v802 = vrot.slane %v70, %v801
    %805 = vrot.lane.b32.xlu0 %v797, 32
    %v806 = vpop.permute.xlu0 %805
    %v807 = vsel %vm695, %v806, 0
    %809 = vmatprep.subr.mxu0 0.0
    %810 = vmatpush1.msra.mxu0 0.0
    %811 = vmatprep.subr.mxu0 0.0
    %812 = vmatpush1.msra.mxu0 0.0
    %813 = vmatprep.subr.mxu0 0.0
    %814 = vmatpush1.msra.mxu0 0.0
    %815 = vmatprep.subr.mxu0 0.0
    %816 = vmatpush1.msra.mxu0 0.0
    %817 = vmatprep.subr.mxu0 0.0
    %818 = vmatpush1.msra.mxu0 0.0
    %819 = vmatprep.subr.mxu0 0.0
    %820 = vmatpush1.msra.mxu0 0.0
    %821 = vmatprep.subr.mxu0 0.0
    %822 = vmatpush1.msra.mxu0 0.0
    %823 = vmatprep.subr.mxu0 0.0
    %824 = vmatpush1.msra.mxu0 0.0
    %825 = vmatprep.subr.mxu0 0.0
    %826 = vmatpush1.msra.mxu0 0.0
    %827 = vmatprep.subr.mxu0 0.0
    %828 = vmatpush1.msra.mxu0 0.0
    %829 = vmatprep.subr.mxu0 0.0
    %830 = vmatpush1.msra.mxu0 0.0
    %831 = vmatprep.subr.mxu0 0.0
    %832 = vmatpush1.msra.mxu0 0.0
    %833 = vmatprep.subr.mxu0 0.0
    %834 = vmatpush1.msra.mxu0 %v69
    %835 = vmatprep.subr.mxu0 0.0
    %836 = vmatpush1.msra.mxu0 %v68
    %837 = vmatprep.subr.mxu0 0.0
    %838 = vmatpush1.msra.mxu0 %v67
    %839 = vmatprep.subr.mxu0 0.0
    %840 = vmatpush1.msra.mxu0 %v66
    %841 = vmatprep.subr.mxu0 0.0
    %842 = vmatpush2.msra.mxu0 0.0
    %843 = vmatprep.subr.mxu0 0.0
    %844 = vmatpush2.msra.mxu0 0.0
    %845 = vmatprep.subr.mxu0 0.0
    %846 = vmatpush2.msra.mxu0 0.0
    %847 = vmatprep.subr.mxu0 0.0
    %848 = vmatpush2.msra.mxu0 0.0
    %849 = vmatprep.subr.mxu0 0.0
    %850 = vmatpush2.msra.mxu0 0.0
    %851 = vmatprep.subr.mxu0 0.0
    %852 = vmatpush2.msra.mxu0 0.0
    %853 = vmatprep.subr.mxu0 0.0
    %854 = vmatpush2.msra.mxu0 0.0
    %855 = vmatprep.subr.mxu0 0.0
    %856 = vmatpush2.msra.mxu0 0.0
    %857 = vmatprep.subr.mxu0 0.0
    %858 = vmatpush2.msra.mxu0 0.0
    %859 = vmatprep.subr.mxu0 0.0
    %860 = vmatpush2.msra.mxu0 0.0
    %861 = vmatprep.subr.mxu0 0.0
    %862 = vmatpush2.msra.mxu0 0.0
    %863 = vmatprep.subr.mxu0 0.0
    %864 = vmatpush2.msra.mxu0 0.0
    %865 = vmatprep.subr.mxu0 0.0
    %866 = vmatpush2.msra.mxu0 0.0
    %867 = vmatprep.subr.mxu0 0.0
    %868 = vmatpush2.msra.mxu0 0.0
    %869 = vmatprep.subr.mxu0 0.0
    %870 = vmatpush2.msra.mxu0 0.0
    %871 = vmatprep.subr.mxu0 0.0
    %872 = vmatpush2.msra.mxu0 0.0
    %873 = vmatprep.mubr.f32.mxu0 0.0
    %874 = vmatmul.mubr.f32.gmra.mxu0 %v807
    %v875 = vpop.f32.mrf.mxu0
    %v876 = vadd.f32 %v802, %v875
    %v877 = vpop.f32.mrf.mxu0
    %878 = vdwg.mxu0
    %vm879 = vcmask 58368
    %880 = vst.msk [vmem:[#allocation10] sm:$0x3] %vm879, %v876
    %v881 = vld [vmem:[%s228] sm:$0x3]
    %882 = vmatprep.subr.mxu0 0.0
    %883 = vmatpush1.msra.mxu0 0.0
    %884 = vmatprep.subr.mxu0 0.0
    %885 = vmatpush1.msra.mxu0 0.0
    %886 = vmatprep.subr.mxu0 0.0
    %887 = vmatpush1.msra.mxu0 0.0
    %888 = vmatprep.subr.mxu0 0.0
    %889 = vmatpush1.msra.mxu0 0.0
    %890 = vmatprep.subr.mxu0 0.0
    %891 = vmatpush1.msra.mxu0 0.0
    %892 = vmatprep.subr.mxu0 0.0
    %893 = vmatpush1.msra.mxu0 0.0
    %894 = vmatprep.subr.mxu0 0.0
    %895 = vmatpush1.msra.mxu0 0.0
    %896 = vmatprep.subr.mxu0 0.0
    %897 = vmatpush1.msra.mxu0 0.0
    %898 = vmatprep.subr.mxu0 0.0
    %899 = vmatpush1.msra.mxu0 0.0
    %900 = vmatprep.subr.mxu0 0.0
    %901 = vmatpush1.msra.mxu0 0.0
    %902 = vmatprep.subr.mxu0 0.0
    %903 = vmatpush1.msra.mxu0 0.0
    %904 = vmatprep.subr.mxu0 0.0
    %905 = vmatpush1.msra.mxu0 0.0
    %906 = vmatprep.subr.mxu0 0.0
    %907 = vmatpush1.msra.mxu0 %v64
    %908 = vmatprep.subr.mxu0 0.0
    %909 = vmatpush1.msra.mxu0 %v63
    %910 = vmatprep.subr.mxu0 0.0
    %911 = vmatpush1.msra.mxu0 %v62
    %912 = vmatprep.subr.mxu0 0.0
    %913 = vmatpush1.msra.mxu0 %v61
    %914 = vmatprep.subr.mxu0 0.0
    %915 = vmatpush2.msra.mxu0 0.0
    %916 = vmatprep.subr.mxu0 0.0
    %917 = vmatpush2.msra.mxu0 0.0
    %918 = vmatprep.subr.mxu0 0.0
    %919 = vmatpush2.msra.mxu0 0.0
    %920 = vmatprep.subr.mxu0 0.0
    %921 = vmatpush2.msra.mxu0 0.0
    %922 = vmatprep.subr.mxu0 0.0
    %923 = vmatpush2.msra.mxu0 0.0
    %924 = vmatprep.subr.mxu0 0.0
    %925 = vmatpush2.msra.mxu0 0.0
    %926 = vmatprep.subr.mxu0 0.0
    %927 = vmatpush2.msra.mxu0 0.0
    %928 = vmatprep.subr.mxu0 0.0
    %929 = vmatpush2.msra.mxu0 0.0
    %930 = vmatprep.subr.mxu0 0.0
    %931 = vmatpush2.msra.mxu0 0.0
    %932 = vmatprep.subr.mxu0 0.0
    %933 = vmatpush2.msra.mxu0 0.0
    %934 = vmatprep.subr.mxu0 0.0
    %935 = vmatpush2.msra.mxu0 0.0
    %936 = vmatprep.subr.mxu0 0.0
    %937 = vmatpush2.msra.mxu0 0.0
    %938 = vmatprep.subr.mxu0 0.0
    %939 = vmatpush2.msra.mxu0 0.0
    %940 = vmatprep.subr.mxu0 0.0
    %941 = vmatpush2.msra.mxu0 0.0
    %942 = vmatprep.subr.mxu0 0.0
    %943 = vmatpush2.msra.mxu0 0.0
    %944 = vmatprep.subr.mxu0 0.0
    %945 = vmatpush2.msra.mxu0 0.0
    %946 = vmatprep.mubr.f32.mxu0 0.0
    %947 = vmatmul.mubr.f32.gmra.mxu0 %v807
    %v948 = vpop.f32.mrf.mxu0
    %v949 = vadd.f32 0.0, %v948
    %v950 = vpop.f32.mrf.mxu0
    %951 = vdwg.mxu0
    %v952 = vadd.f32 %v881, %v949
    %v953 = vxor.u32 %v952, 2147483648
    %v954 = vmul.f32 %v953, 1.442695
    %v955 = vpow.pop %v954
    %v956 = vadd.f32 %v955, 1.0
    %v957 = vrcp.pop %v956
    %v958 = vmul.f32 1.0, %v957
    %v959 = vtanh.pop %v952
    %v960 = vmul.f32 %v958, %v791
    %962 = vrot.lane.b32.xlu0 %v959, 64
    %v963 = vpop.permute.xlu0 %962
    %v965 = vmul.f32 %v958, %v963
    %967 = vrot.lane.b32.xlu0 %v965, 32
    %v968 = vpop.permute.xlu0 %967
    %v970 = vadd.f32 %v960, %v968
    %v971 = vtanh.pop %v970
    %973 = vrot.lane.b32.xlu0 %v971, 64
    %v974 = vpop.permute.xlu0 %973
    %v976 = vmul.f32 %v958, %v974
    %978 = vrot.lane.b32.xlu0 %v976, 32
    %v979 = vpop.permute.xlu0 %978
    %v980 = vsel %vm695, %v979, 0
    %982 = vmatprep.subr.mxu0 0.0
    %983 = vmatpush1.msra.mxu0 0.0
    %984 = vmatprep.subr.mxu0 0.0
    %985 = vmatpush1.msra.mxu0 0.0
    %986 = vmatprep.subr.mxu0 0.0
    %987 = vmatpush1.msra.mxu0 0.0
    %988 = vmatprep.subr.mxu0 0.0
    %989 = vmatpush1.msra.mxu0 0.0
    %990 = vmatprep.subr.mxu0 0.0
    %991 = vmatpush1.msra.mxu0 0.0
    %992 = vmatprep.subr.mxu0 0.0
    %993 = vmatpush1.msra.mxu0 0.0
    %994 = vmatprep.subr.mxu0 0.0
    %995 = vmatpush1.msra.mxu0 0.0
    %996 = vmatprep.subr.mxu0 0.0
    %997 = vmatpush1.msra.mxu0 0.0
    %998 = vmatprep.subr.mxu0 0.0
    %999 = vmatpush1.msra.mxu0 0.0
    %1000 = vmatprep.subr.mxu0 0.0
    %1001 = vmatpush1.msra.mxu0 0.0
    %1002 = vmatprep.subr.mxu0 0.0
    %1003 = vmatpush1.msra.mxu0 0.0
    %1004 = vmatprep.subr.mxu0 0.0
    %1005 = vmatpush1.msra.mxu0 0.0
    %1006 = vmatprep.subr.mxu0 0.0
    %1007 = vmatpush1.msra.mxu0 %v69
    %1008 = vmatprep.subr.mxu0 0.0
    %1009 = vmatpush1.msra.mxu0 %v68
    %1010 = vmatprep.subr.mxu0 0.0
    %1011 = vmatpush1.msra.mxu0 %v67
    %1012 = vmatprep.subr.mxu0 0.0
    %1013 = vmatpush1.msra.mxu0 %v66
    %1014 = vmatprep.subr.mxu0 0.0
    %1015 = vmatpush2.msra.mxu0 0.0
    %1016 = vmatprep.subr.mxu0 0.0
    %1017 = vmatpush2.msra.mxu0 0.0
    %1018 = vmatprep.subr.mxu0 0.0
    %1019 = vmatpush2.msra.mxu0 0.0
    %1020 = vmatprep.subr.mxu0 0.0
    %1021 = vmatpush2.msra.mxu0 0.0
    %1022 = vmatprep.subr.mxu0 0.0
    %1023 = vmatpush2.msra.mxu0 0.0
    %1024 = vmatprep.subr.mxu0 0.0
    %1025 = vmatpush2.msra.mxu0 0.0
    %1026 = vmatprep.subr.mxu0 0.0
    %1027 = vmatpush2.msra.mxu0 0.0
    %1028 = vmatprep.subr.mxu0 0.0
    %1029 = vmatpush2.msra.mxu0 0.0
    %1030 = vmatprep.subr.mxu0 0.0
    %1031 = vmatpush2.msra.mxu0 0.0
    %1032 = vmatprep.subr.mxu0 0.0
    %1033 = vmatpush2.msra.mxu0 0.0
    %1034 = vmatprep.subr.mxu0 0.0
    %1035 = vmatpush2.msra.mxu0 0.0
    %1036 = vmatprep.subr.mxu0 0.0
    %1037 = vmatpush2.msra.mxu0 0.0
    %1038 = vmatprep.subr.mxu0 0.0
    %1039 = vmatpush2.msra.mxu0 0.0
    %1040 = vmatprep.subr.mxu0 0.0
    %1041 = vmatpush2.msra.mxu0 0.0
    %1042 = vmatprep.subr.mxu0 0.0
    %1043 = vmatpush2.msra.mxu0 0.0
    %1044 = vmatprep.subr.mxu0 0.0
    %1045 = vmatpush2.msra.mxu0 0.0
    %1046 = vmatprep.mubr.f32.mxu0 0.0
    %1047 = vmatmul.mubr.f32.gmra.mxu0 %v980
    %v1048 = vpop.f32.mrf.mxu0
    %v1049 = vadd.f32 %v802, %v1048
    %v1050 = vpop.f32.mrf.mxu0
    %1051 = vdwg.mxu0
    %s1052 = scalar_lea.vmem [#allocation10], 2
    %1053 = vst.msk [vmem:[%s1052] sm:$0x3] %vm879, %v1049
    %v1054 = vld [vmem:[%s305] sm:$0x3]
    %1055 = vmatprep.subr.mxu0 0.0
    %1056 = vmatpush1.msra.mxu0 0.0
    %1057 = vmatprep.subr.mxu0 0.0
    %1058 = vmatpush1.msra.mxu0 0.0
    %1059 = vmatprep.subr.mxu0 0.0
    %1060 = vmatpush1.msra.mxu0 0.0
    %1061 = vmatprep.subr.mxu0 0.0
    %1062 = vmatpush1.msra.mxu0 0.0
    %1063 = vmatprep.subr.mxu0 0.0
    %1064 = vmatpush1.msra.mxu0 0.0
    %1065 = vmatprep.subr.mxu0 0.0
    %1066 = vmatpush1.msra.mxu0 0.0
    %1067 = vmatprep.subr.mxu0 0.0
    %1068 = vmatpush1.msra.mxu0 0.0
    %1069 = vmatprep.subr.mxu0 0.0
    %1070 = vmatpush1.msra.mxu0 0.0
    %1071 = vmatprep.subr.mxu0 0.0
    %1072 = vmatpush1.msra.mxu0 0.0
    %1073 = vmatprep.subr.mxu0 0.0
    %1074 = vmatpush1.msra.mxu0 0.0
    %1075 = vmatprep.subr.mxu0 0.0
    %1076 = vmatpush1.msra.mxu0 0.0
    %1077 = vmatprep.subr.mxu0 0.0
    %1078 = vmatpush1.msra.mxu0 0.0
    %1079 = vmatprep.subr.mxu0 0.0
    %1080 = vmatpush1.msra.mxu0 %v64
    %1081 = vmatprep.subr.mxu0 0.0
    %1082 = vmatpush1.msra.mxu0 %v63
    %1083 = vmatprep.subr.mxu0 0.0
    %1084 = vmatpush1.msra.mxu0 %v62
    %1085 = vmatprep.subr.mxu0 0.0
    %1086 = vmatpush1.msra.mxu0 %v61
    %1087 = vmatprep.subr.mxu0 0.0
    %1088 = vmatpush2.msra.mxu0 0.0
    %1089 = vmatprep.subr.mxu0 0.0
    %1090 = vmatpush2.msra.mxu0 0.0
    %1091 = vmatprep.subr.mxu0 0.0
    %1092 = vmatpush2.msra.mxu0 0.0
    %1093 = vmatprep.subr.mxu0 0.0
    %1094 = vmatpush2.msra.mxu0 0.0
    %1095 = vmatprep.subr.mxu0 0.0
    %1096 = vmatpush2.msra.mxu0 0.0
    %1097 = vmatprep.subr.mxu0 0.0
    %1098 = vmatpush2.msra.mxu0 0.0
    %1099 = vmatprep.subr.mxu0 0.0
    %1100 = vmatpush2.msra.mxu0 0.0
    %1101 = vmatprep.subr.mxu0 0.0
    %1102 = vmatpush2.msra.mxu0 0.0
    %1103 = vmatprep.subr.mxu0 0.0
    %1104 = vmatpush2.msra.mxu0 0.0
    %1105 = vmatprep.subr.mxu0 0.0
    %1106 = vmatpush2.msra.mxu0 0.0
    %1107 = vmatprep.subr.mxu0 0.0
    %1108 = vmatpush2.msra.mxu0 0.0
    %1109 = vmatprep.subr.mxu0 0.0
    %1110 = vmatpush2.msra.mxu0 0.0
    %1111 = vmatprep.subr.mxu0 0.0
    %1112 = vmatpush2.msra.mxu0 0.0
    %1113 = vmatprep.subr.mxu0 0.0
    %1114 = vmatpush2.msra.mxu0 0.0
    %1115 = vmatprep.subr.mxu0 0.0
    %1116 = vmatpush2.msra.mxu0 0.0
    %1117 = vmatprep.subr.mxu0 0.0
    %1118 = vmatpush2.msra.mxu0 0.0
    %1119 = vmatprep.mubr.f32.mxu0 0.0
    %1120 = vmatmul.mubr.f32.gmra.mxu0 %v980
    %v1121 = vpop.f32.mrf.mxu0
    %v1122 = vadd.f32 0.0, %v1121
    %v1123 = vpop.f32.mrf.mxu0
    %1124 = vdwg.mxu0
    %v1125 = vadd.f32 %v1054, %v1122
    %v1126 = vxor.u32 %v1125, 2147483648
    %v1127 = vmul.f32 %v1126, 1.442695
    %v1128 = vpow.pop %v1127
    %v1129 = vadd.f32 %v1128, 1.0
    %v1130 = vrcp.pop %v1129
    %v1131 = vmul.f32 1.0, %v1130
    %v1132 = vtanh.pop %v1125
    %v1133 = vmul.f32 %v1131, %v970
    %1135 = vrot.lane.b32.xlu0 %v1132, 64
    %v1136 = vpop.permute.xlu0 %1135
    %v1138 = vmul.f32 %v1131, %v1136
    %1140 = vrot.lane.b32.xlu0 %v1138, 32
    %v1141 = vpop.permute.xlu0 %1140
    %v1143 = vadd.f32 %v1133, %v1141
    %v1144 = vtanh.pop %v1143
    %1146 = vrot.lane.b32.xlu0 %v1144, 64
    %v1147 = vpop.permute.xlu0 %1146
    %v1149 = vmul.f32 %v1131, %v1147
    %1151 = vrot.lane.b32.xlu0 %v1149, 32
    %v1152 = vpop.permute.xlu0 %1151
    %v1153 = vsel %vm695, %v1152, 0
    %1155 = vmatprep.subr.mxu0 0.0
    %1156 = vmatpush1.msra.mxu0 0.0
    %1157 = vmatprep.subr.mxu0 0.0
    %1158 = vmatpush1.msra.mxu0 0.0
    %1159 = vmatprep.subr.mxu0 0.0
    %1160 = vmatpush1.msra.mxu0 0.0
    %1161 = vmatprep.subr.mxu0 0.0
    %1162 = vmatpush1.msra.mxu0 0.0
    %1163 = vmatprep.subr.mxu0 0.0
    %1164 = vmatpush1.msra.mxu0 0.0
    %1165 = vmatprep.subr.mxu0 0.0
    %1166 = vmatpush1.msra.mxu0 0.0
    %1167 = vmatprep.subr.mxu0 0.0
    %1168 = vmatpush1.msra.mxu0 0.0
    %1169 = vmatprep.subr.mxu0 0.0
    %1170 = vmatpush1.msra.mxu0 0.0
    %1171 = vmatprep.subr.mxu0 0.0
    %1172 = vmatpush1.msra.mxu0 0.0
    %1173 = vmatprep.subr.mxu0 0.0
    %1174 = vmatpush1.msra.mxu0 0.0
    %1175 = vmatprep.subr.mxu0 0.0
    %1176 = vmatpush1.msra.mxu0 0.0
    %1177 = vmatprep.subr.mxu0 0.0
    %1178 = vmatpush1.msra.mxu0 0.0
    %1179 = vmatprep.subr.mxu0 0.0
    %1180 = vmatpush1.msra.mxu0 %v69
    %1181 = vmatprep.subr.mxu0 0.0
    %1182 = vmatpush1.msra.mxu0 %v68
    %1183 = vmatprep.subr.mxu0 0.0
    %1184 = vmatpush1.msra.mxu0 %v67
    %1185 = vmatprep.subr.mxu0 0.0
    %1186 = vmatpush1.msra.mxu0 %v66
    %1187 = vmatprep.subr.mxu0 0.0
    %1188 = vmatpush2.msra.mxu0 0.0
    %1189 = vmatprep.subr.mxu0 0.0
    %1190 = vmatpush2.msra.mxu0 0.0
    %1191 = vmatprep.subr.mxu0 0.0
    %1192 = vmatpush2.msra.mxu0 0.0
    %1193 = vmatprep.subr.mxu0 0.0
    %1194 = vmatpush2.msra.mxu0 0.0
    %1195 = vmatprep.subr.mxu0 0.0
    %1196 = vmatpush2.msra.mxu0 0.0
    %1197 = vmatprep.subr.mxu0 0.0
    %1198 = vmatpush2.msra.mxu0 0.0
    %1199 = vmatprep.subr.mxu0 0.0
    %1200 = vmatpush2.msra.mxu0 0.0
    %1201 = vmatprep.subr.mxu0 0.0
    %1202 = vmatpush2.msra.mxu0 0.0
    %1203 = vmatprep.subr.mxu0 0.0
    %1204 = vmatpush2.msra.mxu0 0.0
    %1205 = vmatprep.subr.mxu0 0.0
    %1206 = vmatpush2.msra.mxu0 0.0
    %1207 = vmatprep.subr.mxu0 0.0
    %1208 = vmatpush2.msra.mxu0 0.0
    %1209 = vmatprep.subr.mxu0 0.0
    %1210 = vmatpush2.msra.mxu0 0.0
    %1211 = vmatprep.subr.mxu0 0.0
    %1212 = vmatpush2.msra.mxu0 0.0
    %1213 = vmatprep.subr.mxu0 0.0
    %1214 = vmatpush2.msra.mxu0 0.0
    %1215 = vmatprep.subr.mxu0 0.0
    %1216 = vmatpush2.msra.mxu0 0.0
    %1217 = vmatprep.subr.mxu0 0.0
    %1218 = vmatpush2.msra.mxu0 0.0
    %1219 = vmatprep.mubr.f32.mxu0 0.0
    %1220 = vmatmul.mubr.f32.gmra.mxu0 %v1153
    %v1221 = vpop.f32.mrf.mxu0
    %v1222 = vadd.f32 %v802, %v1221
    %v1223 = vpop.f32.mrf.mxu0
    %1224 = vdwg.mxu0
    %s1225 = scalar_lea.vmem [#allocation10], 4
    %1226 = vst.msk [vmem:[%s1225] sm:$0x3] %vm879, %v1222
    %v1227 = vld [vmem:[%s382] sm:$0x3]
    %1228 = vmatprep.subr.mxu0 0.0
    %1229 = vmatpush1.msra.mxu0 0.0
    %1230 = vmatprep.subr.mxu0 0.0
    %1231 = vmatpush1.msra.mxu0 0.0
    %1232 = vmatprep.subr.mxu0 0.0
    %1233 = vmatpush1.msra.mxu0 0.0
    %1234 = vmatprep.subr.mxu0 0.0
    %1235 = vmatpush1.msra.mxu0 0.0
    %1236 = vmatprep.subr.mxu0 0.0
    %1237 = vmatpush1.msra.mxu0 0.0
    %1238 = vmatprep.subr.mxu0 0.0
    %1239 = vmatpush1.msra.mxu0 0.0
    %1240 = vmatprep.subr.mxu0 0.0
    %1241 = vmatpush1.msra.mxu0 0.0
    %1242 = vmatprep.subr.mxu0 0.0
    %1243 = vmatpush1.msra.mxu0 0.0
    %1244 = vmatprep.subr.mxu0 0.0
    %1245 = vmatpush1.msra.mxu0 0.0
    %1246 = vmatprep.subr.mxu0 0.0
    %1247 = vmatpush1.msra.mxu0 0.0
    %1248 = vmatprep.subr.mxu0 0.0
    %1249 = vmatpush1.msra.mxu0 0.0
    %1250 = vmatprep.subr.mxu0 0.0
    %1251 = vmatpush1.msra.mxu0 0.0
    %1252 = vmatprep.subr.mxu0 0.0
    %1253 = vmatpush1.msra.mxu0 %v64
    %1254 = vmatprep.subr.mxu0 0.0
    %1255 = vmatpush1.msra.mxu0 %v63
    %1256 = vmatprep.subr.mxu0 0.0
    %1257 = vmatpush1.msra.mxu0 %v62
    %1258 = vmatprep.subr.mxu0 0.0
    %1259 = vmatpush1.msra.mxu0 %v61
    %1260 = vmatprep.subr.mxu0 0.0
    %1261 = vmatpush2.msra.mxu0 0.0
    %1262 = vmatprep.subr.mxu0 0.0
    %1263 = vmatpush2.msra.mxu0 0.0
    %1264 = vmatprep.subr.mxu0 0.0
    %1265 = vmatpush2.msra.mxu0 0.0
    %1266 = vmatprep.subr.mxu0 0.0
    %1267 = vmatpush2.msra.mxu0 0.0
    %1268 = vmatprep.subr.mxu0 0.0
    %1269 = vmatpush2.msra.mxu0 0.0
    %1270 = vmatprep.subr.mxu0 0.0
    %1271 = vmatpush2.msra.mxu0 0.0
    %1272 = vmatprep.subr.mxu0 0.0
    %1273 = vmatpush2.msra.mxu0 0.0
    %1274 = vmatprep.subr.mxu0 0.0
    %1275 = vmatpush2.msra.mxu0 0.0
    %1276 = vmatprep.subr.mxu0 0.0
    %1277 = vmatpush2.msra.mxu0 0.0
    %1278 = vmatprep.subr.mxu0 0.0
    %1279 = vmatpush2.msra.mxu0 0.0
    %1280 = vmatprep.subr.mxu0 0.0
    %1281 = vmatpush2.msra.mxu0 0.0
    %1282 = vmatprep.subr.mxu0 0.0
    %1283 = vmatpush2.msra.mxu0 0.0
    %1284 = vmatprep.subr.mxu0 0.0
    %1285 = vmatpush2.msra.mxu0 0.0
    %1286 = vmatprep.subr.mxu0 0.0
    %1287 = vmatpush2.msra.mxu0 0.0
    %1288 = vmatprep.subr.mxu0 0.0
    %1289 = vmatpush2.msra.mxu0 0.0
    %1290 = vmatprep.subr.mxu0 0.0
    %1291 = vmatpush2.msra.mxu0 0.0
    %1292 = vmatprep.mubr.f32.mxu0 0.0
    %1293 = vmatmul.mubr.f32.gmra.mxu0 %v1153
    %v1294 = vpop.f32.mrf.mxu0
    %v1295 = vadd.f32 0.0, %v1294
    %v1296 = vpop.f32.mrf.mxu0
    %1297 = vdwg.mxu0
    %v1298 = vadd.f32 %v1227, %v1295
    %v1299 = vxor.u32 %v1298, 2147483648
    %v1300 = vmul.f32 %v1299, 1.442695
    %v1301 = vpow.pop %v1300
    %v1302 = vadd.f32 %v1301, 1.0
    %v1303 = vrcp.pop %v1302
    %v1304 = vmul.f32 1.0, %v1303
    %v1305 = vtanh.pop %v1298
    %v1306 = vmul.f32 %v1304, %v1143
    %1308 = vrot.lane.b32.xlu0 %v1305, 64
    %v1309 = vpop.permute.xlu0 %1308
    %v1311 = vmul.f32 %v1304, %v1309
    %1313 = vrot.lane.b32.xlu0 %v1311, 32
    %v1314 = vpop.permute.xlu0 %1313
    %v1316 = vadd.f32 %v1306, %v1314
    %v1317 = vtanh.pop %v1316
    %1319 = vrot.lane.b32.xlu0 %v1317, 64
    %v1320 = vpop.permute.xlu0 %1319
    %v1322 = vmul.f32 %v1304, %v1320
    %1324 = vrot.lane.b32.xlu0 %v1322, 32
    %v1325 = vpop.permute.xlu0 %1324
    %v1326 = vsel %vm695, %v1325, 0
    %1328 = vmatprep.subr.mxu0 0.0
    %1329 = vmatpush1.msra.mxu0 0.0
    %1330 = vmatprep.subr.mxu0 0.0
    %1331 = vmatpush1.msra.mxu0 0.0
    %1332 = vmatprep.subr.mxu0 0.0
    %1333 = vmatpush1.msra.mxu0 0.0
    %1334 = vmatprep.subr.mxu0 0.0
    %1335 = vmatpush1.msra.mxu0 0.0
    %1336 = vmatprep.subr.mxu0 0.0
    %1337 = vmatpush1.msra.mxu0 0.0
    %1338 = vmatprep.subr.mxu0 0.0
    %1339 = vmatpush1.msra.mxu0 0.0
    %1340 = vmatprep.subr.mxu0 0.0
    %1341 = vmatpush1.msra.mxu0 0.0
    %1342 = vmatprep.subr.mxu0 0.0
    %1343 = vmatpush1.msra.mxu0 0.0
    %1344 = vmatprep.subr.mxu0 0.0
    %1345 = vmatpush1.msra.mxu0 0.0
    %1346 = vmatprep.subr.mxu0 0.0
    %1347 = vmatpush1.msra.mxu0 0.0
    %1348 = vmatprep.subr.mxu0 0.0
    %1349 = vmatpush1.msra.mxu0 0.0
    %1350 = vmatprep.subr.mxu0 0.0
    %1351 = vmatpush1.msra.mxu0 0.0
    %1352 = vmatprep.subr.mxu0 0.0
    %1353 = vmatpush1.msra.mxu0 %v69
    %1354 = vmatprep.subr.mxu0 0.0
    %1355 = vmatpush1.msra.mxu0 %v68
    %1356 = vmatprep.subr.mxu0 0.0
    %1357 = vmatpush1.msra.mxu0 %v67
    %1358 = vmatprep.subr.mxu0 0.0
    %1359 = vmatpush1.msra.mxu0 %v66
    %1360 = vmatprep.subr.mxu0 0.0
    %1361 = vmatpush2.msra.mxu0 0.0
    %1362 = vmatprep.subr.mxu0 0.0
    %1363 = vmatpush2.msra.mxu0 0.0
    %1364 = vmatprep.subr.mxu0 0.0
    %1365 = vmatpush2.msra.mxu0 0.0
    %1366 = vmatprep.subr.mxu0 0.0
    %1367 = vmatpush2.msra.mxu0 0.0
    %1368 = vmatprep.subr.mxu0 0.0
    %1369 = vmatpush2.msra.mxu0 0.0
    %1370 = vmatprep.subr.mxu0 0.0
    %1371 = vmatpush2.msra.mxu0 0.0
    %1372 = vmatprep.subr.mxu0 0.0
    %1373 = vmatpush2.msra.mxu0 0.0
    %1374 = vmatprep.subr.mxu0 0.0
    %1375 = vmatpush2.msra.mxu0 0.0
    %1376 = vmatprep.subr.mxu0 0.0
    %1377 = vmatpush2.msra.mxu0 0.0
    %1378 = vmatprep.subr.mxu0 0.0
    %1379 = vmatpush2.msra.mxu0 0.0
    %1380 = vmatprep.subr.mxu0 0.0
    %1381 = vmatpush2.msra.mxu0 0.0
    %1382 = vmatprep.subr.mxu0 0.0
    %1383 = vmatpush2.msra.mxu0 0.0
    %1384 = vmatprep.subr.mxu0 0.0
    %1385 = vmatpush2.msra.mxu0 0.0
    %1386 = vmatprep.subr.mxu0 0.0
    %1387 = vmatpush2.msra.mxu0 0.0
    %1388 = vmatprep.subr.mxu0 0.0
    %1389 = vmatpush2.msra.mxu0 0.0
    %1390 = vmatprep.subr.mxu0 0.0
    %1391 = vmatpush2.msra.mxu0 0.0
    %1392 = vmatprep.mubr.f32.mxu0 0.0
    %1393 = vmatmul.mubr.f32.gmra.mxu0 %v1326
    %v1394 = vpop.f32.mrf.mxu0
    %v1395 = vadd.f32 %v802, %v1394
    %v1396 = vpop.f32.mrf.mxu0
    %1397 = vdwg.mxu0
    %s1398 = scalar_lea.vmem [#allocation10], 6
    %1399 = vst.msk [vmem:[%s1398] sm:$0x3] %vm879, %v1395
    %v1400 = vld [vmem:[%s459] sm:$0x3]
    %1401 = vmatprep.subr.mxu0 0.0
    %1402 = vmatpush1.msra.mxu0 0.0
    %1403 = vmatprep.subr.mxu0 0.0
    %1404 = vmatpush1.msra.mxu0 0.0
    %1405 = vmatprep.subr.mxu0 0.0
    %1406 = vmatpush1.msra.mxu0 0.0
    %1407 = vmatprep.subr.mxu0 0.0
    %1408 = vmatpush1.msra.mxu0 0.0
    %1409 = vmatprep.subr.mxu0 0.0
    %1410 = vmatpush1.msra.mxu0 0.0
    %1411 = vmatprep.subr.mxu0 0.0
    %1412 = vmatpush1.msra.mxu0 0.0
    %1413 = vmatprep.subr.mxu0 0.0
    %1414 = vmatpush1.msra.mxu0 0.0
    %1415 = vmatprep.subr.mxu0 0.0
    %1416 = vmatpush1.msra.mxu0 0.0
    %1417 = vmatprep.subr.mxu0 0.0
    %1418 = vmatpush1.msra.mxu0 0.0
    %1419 = vmatprep.subr.mxu0 0.0
    %1420 = vmatpush1.msra.mxu0 0.0
    %1421 = vmatprep.subr.mxu0 0.0
    %1422 = vmatpush1.msra.mxu0 0.0
    %1423 = vmatprep.subr.mxu0 0.0
    %1424 = vmatpush1.msra.mxu0 0.0
    %1425 = vmatprep.subr.mxu0 0.0
    %1426 = vmatpush1.msra.mxu0 %v64
    %1427 = vmatprep.subr.mxu0 0.0
    %1428 = vmatpush1.msra.mxu0 %v63
    %1429 = vmatprep.subr.mxu0 0.0
    %1430 = vmatpush1.msra.mxu0 %v62
    %1431 = vmatprep.subr.mxu0 0.0
    %1432 = vmatpush1.msra.mxu0 %v61
    %1433 = vmatprep.subr.mxu0 0.0
    %1434 = vmatpush2.msra.mxu0 0.0
    %1435 = vmatprep.subr.mxu0 0.0
    %1436 = vmatpush2.msra.mxu0 0.0
    %1437 = vmatprep.subr.mxu0 0.0
    %1438 = vmatpush2.msra.mxu0 0.0
    %1439 = vmatprep.subr.mxu0 0.0
    %1440 = vmatpush2.msra.mxu0 0.0
    %1441 = vmatprep.subr.mxu0 0.0
    %1442 = vmatpush2.msra.mxu0 0.0
    %1443 = vmatprep.subr.mxu0 0.0
    %1444 = vmatpush2.msra.mxu0 0.0
    %1445 = vmatprep.subr.mxu0 0.0
    %1446 = vmatpush2.msra.mxu0 0.0
    %1447 = vmatprep.subr.mxu0 0.0
    %1448 = vmatpush2.msra.mxu0 0.0
    %1449 = vmatprep.subr.mxu0 0.0
    %1450 = vmatpush2.msra.mxu0 0.0
    %1451 = vmatprep.subr.mxu0 0.0
    %1452 = vmatpush2.msra.mxu0 0.0
    %1453 = vmatprep.subr.mxu0 0.0
    %1454 = vmatpush2.msra.mxu0 0.0
    %1455 = vmatprep.subr.mxu0 0.0
    %1456 = vmatpush2.msra.mxu0 0.0
    %1457 = vmatprep.subr.mxu0 0.0
    %1458 = vmatpush2.msra.mxu0 0.0
    %1459 = vmatprep.subr.mxu0 0.0
    %1460 = vmatpush2.msra.mxu0 0.0
    %1461 = vmatprep.subr.mxu0 0.0
    %1462 = vmatpush2.msra.mxu0 0.0
    %1463 = vmatprep.subr.mxu0 0.0
    %1464 = vmatpush2.msra.mxu0 0.0
    %1465 = vmatprep.mubr.f32.mxu0 0.0
    %1466 = vmatmul.mubr.f32.gmra.mxu0 %v1326
    %v1467 = vpop.f32.mrf.mxu0
    %v1468 = vadd.f32 0.0, %v1467
    %v1469 = vpop.f32.mrf.mxu0
    %1470 = vdwg.mxu0
    %v1471 = vadd.f32 %v1400, %v1468
    %v1472 = vxor.u32 %v1471, 2147483648
    %v1473 = vmul.f32 %v1472, 1.442695
    %v1474 = vpow.pop %v1473
    %v1475 = vadd.f32 %v1474, 1.0
    %v1476 = vrcp.pop %v1475
    %v1477 = vmul.f32 1.0, %v1476
    %v1478 = vtanh.pop %v1471
    %v1479 = vmul.f32 %v1477, %v1316
    %1481 = vrot.lane.b32.xlu0 %v1478, 64
    %v1482 = vpop.permute.xlu0 %1481
    %v1484 = vmul.f32 %v1477, %v1482
    %1486 = vrot.lane.b32.xlu0 %v1484, 32
    %v1487 = vpop.permute.xlu0 %1486
    %v1489 = vadd.f32 %v1479, %v1487
    %v1490 = vtanh.pop %v1489
    %1492 = vrot.lane.b32.xlu0 %v1490, 64
    %v1493 = vpop.permute.xlu0 %1492
    %v1495 = vmul.f32 %v1477, %v1493
    %1497 = vrot.lane.b32.xlu0 %v1495, 32
    %v1498 = vpop.permute.xlu0 %1497
    %v1499 = vsel %vm695, %v1498, 0
    %1501 = vmatprep.subr.mxu0 0.0
    %1502 = vmatpush1.msra.mxu0 0.0
    %1503 = vmatprep.subr.mxu0 0.0
    %1504 = vmatpush1.msra.mxu0 0.0
    %1505 = vmatprep.subr.mxu0 0.0
    %1506 = vmatpush1.msra.mxu0 0.0
    %1507 = vmatprep.subr.mxu0 0.0
    %1508 = vmatpush1.msra.mxu0 0.0
    %1509 = vmatprep.subr.mxu0 0.0
    %1510 = vmatpush1.msra.mxu0 0.0
    %1511 = vmatprep.subr.mxu0 0.0
    %1512 = vmatpush1.msra.mxu0 0.0
    %1513 = vmatprep.subr.mxu0 0.0
    %1514 = vmatpush1.msra.mxu0 0.0
    %1515 = vmatprep.subr.mxu0 0.0
    %1516 = vmatpush1.msra.mxu0 0.0
    %1517 = vmatprep.subr.mxu0 0.0
    %1518 = vmatpush1.msra.mxu0 0.0
    %1519 = vmatprep.subr.mxu0 0.0
    %1520 = vmatpush1.msra.mxu0 0.0
    %1521 = vmatprep.subr.mxu0 0.0
    %1522 = vmatpush1.msra.mxu0 0.0
    %1523 = vmatprep.subr.mxu0 0.0
    %1524 = vmatpush1.msra.mxu0 0.0
    %1525 = vmatprep.subr.mxu0 0.0
    %1526 = vmatpush1.msra.mxu0 %v69
    %1527 = vmatprep.subr.mxu0 0.0
    %1528 = vmatpush1.msra.mxu0 %v68
    %1529 = vmatprep.subr.mxu0 0.0
    %1530 = vmatpush1.msra.mxu0 %v67
    %1531 = vmatprep.subr.mxu0 0.0
    %1532 = vmatpush1.msra.mxu0 %v66
    %1533 = vmatprep.subr.mxu0 0.0
    %1534 = vmatpush2.msra.mxu0 0.0
    %1535 = vmatprep.subr.mxu0 0.0
    %1536 = vmatpush2.msra.mxu0 0.0
    %1537 = vmatprep.subr.mxu0 0.0
    %1538 = vmatpush2.msra.mxu0 0.0
    %1539 = vmatprep.subr.mxu0 0.0
    %1540 = vmatpush2.msra.mxu0 0.0
    %1541 = vmatprep.subr.mxu0 0.0
    %1542 = vmatpush2.msra.mxu0 0.0
    %1543 = vmatprep.subr.mxu0 0.0
    %1544 = vmatpush2.msra.mxu0 0.0
    %1545 = vmatprep.subr.mxu0 0.0
    %1546 = vmatpush2.msra.mxu0 0.0
    %1547 = vmatprep.subr.mxu0 0.0
    %1548 = vmatpush2.msra.mxu0 0.0
    %1549 = vmatprep.subr.mxu0 0.0
    %1550 = vmatpush2.msra.mxu0 0.0
    %1551 = vmatprep.subr.mxu0 0.0
    %1552 = vmatpush2.msra.mxu0 0.0
    %1553 = vmatprep.subr.mxu0 0.0
    %1554 = vmatpush2.msra.mxu0 0.0
    %1555 = vmatprep.subr.mxu0 0.0
    %1556 = vmatpush2.msra.mxu0 0.0
    %1557 = vmatprep.subr.mxu0 0.0
    %1558 = vmatpush2.msra.mxu0 0.0
    %1559 = vmatprep.subr.mxu0 0.0
    %1560 = vmatpush2.msra.mxu0 0.0
    %1561 = vmatprep.subr.mxu0 0.0
    %1562 = vmatpush2.msra.mxu0 0.0
    %1563 = vmatprep.subr.mxu0 0.0
    %1564 = vmatpush2.msra.mxu0 0.0
    %1565 = vmatprep.mubr.f32.mxu0 0.0
    %1566 = vmatmul.mubr.f32.gmra.mxu0 %v1499
    %v1567 = vpop.f32.mrf.mxu0
    %v1568 = vadd.f32 %v802, %v1567
    %v1569 = vpop.f32.mrf.mxu0
    %1570 = vdwg.mxu0
    %s1571 = scalar_lea.vmem [#allocation10], 8
    %1572 = vst.msk [vmem:[%s1571] sm:$0x3] %vm879, %v1568
    %v1573 = vld [vmem:[%s536] sm:$0x3]
    %1574 = vmatprep.subr.mxu0 0.0
    %1575 = vmatpush1.msra.mxu0 0.0
    %1576 = vmatprep.subr.mxu0 0.0
    %1577 = vmatpush1.msra.mxu0 0.0
    %1578 = vmatprep.subr.mxu0 0.0
    %1579 = vmatpush1.msra.mxu0 0.0
    %1580 = vmatprep.subr.mxu0 0.0
    %1581 = vmatpush1.msra.mxu0 0.0
    %1582 = vmatprep.subr.mxu0 0.0
    %1583 = vmatpush1.msra.mxu0 0.0
    %1584 = vmatprep.subr.mxu0 0.0
    %1585 = vmatpush1.msra.mxu0 0.0
    %1586 = vmatprep.subr.mxu0 0.0
    %1587 = vmatpush1.msra.mxu0 0.0
    %1588 = vmatprep.subr.mxu0 0.0
    %1589 = vmatpush1.msra.mxu0 0.0
    %1590 = vmatprep.subr.mxu0 0.0
    %1591 = vmatpush1.msra.mxu0 0.0
    %1592 = vmatprep.subr.mxu0 0.0
    %1593 = vmatpush1.msra.mxu0 0.0
    %1594 = vmatprep.subr.mxu0 0.0
    %1595 = vmatpush1.msra.mxu0 0.0
    %1596 = vmatprep.subr.mxu0 0.0
    %1597 = vmatpush1.msra.mxu0 0.0
    %1598 = vmatprep.subr.mxu0 0.0
    %1599 = vmatpush1.msra.mxu0 %v64
    %1600 = vmatprep.subr.mxu0 0.0
    %1601 = vmatpush1.msra.mxu0 %v63
    %1602 = vmatprep.subr.mxu0 0.0
    %1603 = vmatpush1.msra.mxu0 %v62
    %1604 = vmatprep.subr.mxu0 0.0
    %1605 = vmatpush1.msra.mxu0 %v61
    %1606 = vmatprep.subr.mxu0 0.0
    %1607 = vmatpush2.msra.mxu0 0.0
    %1608 = vmatprep.subr.mxu0 0.0
    %1609 = vmatpush2.msra.mxu0 0.0
    %1610 = vmatprep.subr.mxu0 0.0
    %1611 = vmatpush2.msra.mxu0 0.0
    %1612 = vmatprep.subr.mxu0 0.0
    %1613 = vmatpush2.msra.mxu0 0.0
    %1614 = vmatprep.subr.mxu0 0.0
    %1615 = vmatpush2.msra.mxu0 0.0
    %1616 = vmatprep.subr.mxu0 0.0
    %1617 = vmatpush2.msra.mxu0 0.0
    %1618 = vmatprep.subr.mxu0 0.0
    %1619 = vmatpush2.msra.mxu0 0.0
    %1620 = vmatprep.subr.mxu0 0.0
    %1621 = vmatpush2.msra.mxu0 0.0
    %1622 = vmatprep.subr.mxu0 0.0
    %1623 = vmatpush2.msra.mxu0 0.0
    %1624 = vmatprep.subr.mxu0 0.0
    %1625 = vmatpush2.msra.mxu0 0.0
    %1626 = vmatprep.subr.mxu0 0.0
    %1627 = vmatpush2.msra.mxu0 0.0
    %1628 = vmatprep.subr.mxu0 0.0
    %1629 = vmatpush2.msra.mxu0 0.0
    %1630 = vmatprep.subr.mxu0 0.0
    %1631 = vmatpush2.msra.mxu0 0.0
    %1632 = vmatprep.subr.mxu0 0.0
    %1633 = vmatpush2.msra.mxu0 0.0
    %1634 = vmatprep.subr.mxu0 0.0
    %1635 = vmatpush2.msra.mxu0 0.0
    %1636 = vmatprep.subr.mxu0 0.0
    %1637 = vmatpush2.msra.mxu0 0.0
    %1638 = vmatprep.mubr.f32.mxu0 0.0
    %1639 = vmatmul.mubr.f32.gmra.mxu0 %v1499
    %v1640 = vpop.f32.mrf.mxu0
    %v1641 = vadd.f32 0.0, %v1640
    %v1642 = vpop.f32.mrf.mxu0
    %1643 = vdwg.mxu0
    %v1644 = vadd.f32 %v1573, %v1641
    %v1645 = vxor.u32 %v1644, 2147483648
    %v1646 = vmul.f32 %v1645, 1.442695
    %v1647 = vpow.pop %v1646
    %v1648 = vadd.f32 %v1647, 1.0
    %v1649 = vrcp.pop %v1648
    %v1650 = vmul.f32 1.0, %v1649
    %v1651 = vtanh.pop %v1644
    %v1652 = vmul.f32 %v1650, %v1489
    %1654 = vrot.lane.b32.xlu0 %v1651, 64
    %v1655 = vpop.permute.xlu0 %1654
    %v1657 = vmul.f32 %v1650, %v1655
    %1659 = vrot.lane.b32.xlu0 %v1657, 32
    %v1660 = vpop.permute.xlu0 %1659
    %v1662 = vadd.f32 %v1652, %v1660
    %v1663 = vtanh.pop %v1662
    %1665 = vrot.lane.b32.xlu0 %v1663, 64
    %v1666 = vpop.permute.xlu0 %1665
    %v1668 = vmul.f32 %v1650, %v1666
    %1670 = vrot.lane.b32.xlu0 %v1668, 32
    %v1671 = vpop.permute.xlu0 %1670
    %v1672 = vsel %vm695, %v1671, 0
    %1674 = vmatprep.subr.mxu0 0.0
    %1675 = vmatpush1.msra.mxu0 0.0
    %1676 = vmatprep.subr.mxu0 0.0
    %1677 = vmatpush1.msra.mxu0 0.0
    %1678 = vmatprep.subr.mxu0 0.0
    %1679 = vmatpush1.msra.mxu0 0.0
    %1680 = vmatprep.subr.mxu0 0.0
    %1681 = vmatpush1.msra.mxu0 0.0
    %1682 = vmatprep.subr.mxu0 0.0
    %1683 = vmatpush1.msra.mxu0 0.0
    %1684 = vmatprep.subr.mxu0 0.0
    %1685 = vmatpush1.msra.mxu0 0.0
    %1686 = vmatprep.subr.mxu0 0.0
    %1687 = vmatpush1.msra.mxu0 0.0
    %1688 = vmatprep.subr.mxu0 0.0
    %1689 = vmatpush1.msra.mxu0 0.0
    %1690 = vmatprep.subr.mxu0 0.0
    %1691 = vmatpush1.msra.mxu0 0.0
    %1692 = vmatprep.subr.mxu0 0.0
    %1693 = vmatpush1.msra.mxu0 0.0
    %1694 = vmatprep.subr.mxu0 0.0
    %1695 = vmatpush1.msra.mxu0 0.0
    %1696 = vmatprep.subr.mxu0 0.0
    %1697 = vmatpush1.msra.mxu0 0.0
    %1698 = vmatprep.subr.mxu0 0.0
    %1699 = vmatpush1.msra.mxu0 %v69
    %1700 = vmatprep.subr.mxu0 0.0
    %1701 = vmatpush1.msra.mxu0 %v68
    %1702 = vmatprep.subr.mxu0 0.0
    %1703 = vmatpush1.msra.mxu0 %v67
    %1704 = vmatprep.subr.mxu0 0.0
    %1705 = vmatpush1.msra.mxu0 %v66
    %1706 = vmatprep.subr.mxu0 0.0
    %1707 = vmatpush2.msra.mxu0 0.0
    %1708 = vmatprep.subr.mxu0 0.0
    %1709 = vmatpush2.msra.mxu0 0.0
    %1710 = vmatprep.subr.mxu0 0.0
    %1711 = vmatpush2.msra.mxu0 0.0
    %1712 = vmatprep.subr.mxu0 0.0
    %1713 = vmatpush2.msra.mxu0 0.0
    %1714 = vmatprep.subr.mxu0 0.0
    %1715 = vmatpush2.msra.mxu0 0.0
    %1716 = vmatprep.subr.mxu0 0.0
    %1717 = vmatpush2.msra.mxu0 0.0
    %1718 = vmatprep.subr.mxu0 0.0
    %1719 = vmatpush2.msra.mxu0 0.0
    %1720 = vmatprep.subr.mxu0 0.0
    %1721 = vmatpush2.msra.mxu0 0.0
    %1722 = vmatprep.subr.mxu0 0.0
    %1723 = vmatpush2.msra.mxu0 0.0
    %1724 = vmatprep.subr.mxu0 0.0
    %1725 = vmatpush2.msra.mxu0 0.0
    %1726 = vmatprep.subr.mxu0 0.0
    %1727 = vmatpush2.msra.mxu0 0.0
    %1728 = vmatprep.subr.mxu0 0.0
    %1729 = vmatpush2.msra.mxu0 0.0
    %1730 = vmatprep.subr.mxu0 0.0
    %1731 = vmatpush2.msra.mxu0 0.0
    %1732 = vmatprep.subr.mxu0 0.0
    %1733 = vmatpush2.msra.mxu0 0.0
    %1734 = vmatprep.subr.mxu0 0.0
    %1735 = vmatpush2.msra.mxu0 0.0
    %1736 = vmatprep.subr.mxu0 0.0
    %1737 = vmatpush2.msra.mxu0 0.0
    %1738 = vmatprep.mubr.f32.mxu0 0.0
    %1739 = vmatmul.mubr.f32.gmra.mxu0 %v1672
    %v1740 = vpop.f32.mrf.mxu0
    %v1741 = vadd.f32 %v802, %v1740
    %v1742 = vpop.f32.mrf.mxu0
    %1743 = vdwg.mxu0
    %s1744 = scalar_lea.vmem [#allocation10], 10
    %1745 = vst.msk [vmem:[%s1744] sm:$0x3] %vm879, %v1741
    %v1746 = vld [vmem:[%s613] sm:$0x3]
    %1747 = vmatprep.subr.mxu0 0.0
    %1748 = vmatpush1.msra.mxu0 0.0
    %1749 = vmatprep.subr.mxu0 0.0
    %1750 = vmatpush1.msra.mxu0 0.0
    %1751 = vmatprep.subr.mxu0 0.0
    %1752 = vmatpush1.msra.mxu0 0.0
    %1753 = vmatprep.subr.mxu0 0.0
    %1754 = vmatpush1.msra.mxu0 0.0
    %1755 = vmatprep.subr.mxu0 0.0
    %1756 = vmatpush1.msra.mxu0 0.0
    %1757 = vmatprep.subr.mxu0 0.0
    %1758 = vmatpush1.msra.mxu0 0.0
    %1759 = vmatprep.subr.mxu0 0.0
    %1760 = vmatpush1.msra.mxu0 0.0
    %1761 = vmatprep.subr.mxu0 0.0
    %1762 = vmatpush1.msra.mxu0 0.0
    %1763 = vmatprep.subr.mxu0 0.0
    %1764 = vmatpush1.msra.mxu0 0.0
    %1765 = vmatprep.subr.mxu0 0.0
    %1766 = vmatpush1.msra.mxu0 0.0
    %1767 = vmatprep.subr.mxu0 0.0
    %1768 = vmatpush1.msra.mxu0 0.0
    %1769 = vmatprep.subr.mxu0 0.0
    %1770 = vmatpush1.msra.mxu0 0.0
    %1771 = vmatprep.subr.mxu0 0.0
    %1772 = vmatpush1.msra.mxu0 %v64
    %1773 = vmatprep.subr.mxu0 0.0
    %1774 = vmatpush1.msra.mxu0 %v63
    %1775 = vmatprep.subr.mxu0 0.0
    %1776 = vmatpush1.msra.mxu0 %v62
    %1777 = vmatprep.subr.mxu0 0.0
    %1778 = vmatpush1.msra.mxu0 %v61
    %1779 = vmatprep.subr.mxu0 0.0
    %1780 = vmatpush2.msra.mxu0 0.0
    %1781 = vmatprep.subr.mxu0 0.0
    %1782 = vmatpush2.msra.mxu0 0.0
    %1783 = vmatprep.subr.mxu0 0.0
    %1784 = vmatpush2.msra.mxu0 0.0
    %1785 = vmatprep.subr.mxu0 0.0
    %1786 = vmatpush2.msra.mxu0 0.0
    %1787 = vmatprep.subr.mxu0 0.0
    %1788 = vmatpush2.msra.mxu0 0.0
    %1789 = vmatprep.subr.mxu0 0.0
    %1790 = vmatpush2.msra.mxu0 0.0
    %1791 = vmatprep.subr.mxu0 0.0
    %1792 = vmatpush2.msra.mxu0 0.0
    %1793 = vmatprep.subr.mxu0 0.0
    %1794 = vmatpush2.msra.mxu0 0.0
    %1795 = vmatprep.subr.mxu0 0.0
    %1796 = vmatpush2.msra.mxu0 0.0
    %1797 = vmatprep.subr.mxu0 0.0
    %1798 = vmatpush2.msra.mxu0 0.0
    %1799 = vmatprep.subr.mxu0 0.0
    %1800 = vmatpush2.msra.mxu0 0.0
    %1801 = vmatprep.subr.mxu0 0.0
    %1802 = vmatpush2.msra.mxu0 0.0
    %1803 = vmatprep.subr.mxu0 0.0
    %1804 = vmatpush2.msra.mxu0 0.0
    %1805 = vmatprep.subr.mxu0 0.0
    %1806 = vmatpush2.msra.mxu0 0.0
    %1807 = vmatprep.subr.mxu0 0.0
    %1808 = vmatpush2.msra.mxu0 0.0
    %1809 = vmatprep.subr.mxu0 0.0
    %1810 = vmatpush2.msra.mxu0 0.0
    %1811 = vmatprep.mubr.f32.mxu0 0.0
    %1812 = vmatmul.mubr.f32.gmra.mxu0 %v1672
    %v1813 = vpop.f32.mrf.mxu0
    %v1814 = vadd.f32 0.0, %v1813
    %v1815 = vpop.f32.mrf.mxu0
    %1816 = vdwg.mxu0
    %v1817 = vadd.f32 %v1746, %v1814
    %v1818 = vxor.u32 %v1817, 2147483648
    %v1819 = vmul.f32 %v1818, 1.442695
    %v1820 = vpow.pop %v1819
    %v1821 = vadd.f32 %v1820, 1.0
    %v1822 = vrcp.pop %v1821
    %v1823 = vmul.f32 1.0, %v1822
    %v1824 = vtanh.pop %v1817
    %v1825 = vmul.f32 %v1823, %v1662
    %1827 = vrot.lane.b32.xlu0 %v1824, 64
    %v1828 = vpop.permute.xlu0 %1827
    %v1830 = vmul.f32 %v1823, %v1828
    %1832 = vrot.lane.b32.xlu0 %v1830, 32
    %v1833 = vpop.permute.xlu0 %1832
    %v1835 = vadd.f32 %v1825, %v1833
    %v1836 = vtanh.pop %v1835
    %1838 = vrot.lane.b32.xlu0 %v1836, 64
    %v1839 = vpop.permute.xlu0 %1838
    %v1841 = vmul.f32 %v1823, %v1839
    %1843 = vrot.lane.b32.xlu0 %v1841, 32
    %v1844 = vpop.permute.xlu0 %1843
    %v1845 = vsel %vm695, %v1844, 0
    %1847 = vmatprep.subr.mxu0 0.0
    %1848 = vmatpush1.msra.mxu0 0.0
    %1849 = vmatprep.subr.mxu0 0.0
    %1850 = vmatpush1.msra.mxu0 0.0
    %1851 = vmatprep.subr.mxu0 0.0
    %1852 = vmatpush1.msra.mxu0 0.0
    %1853 = vmatprep.subr.mxu0 0.0
    %1854 = vmatpush1.msra.mxu0 0.0
    %1855 = vmatprep.subr.mxu0 0.0
    %1856 = vmatpush1.msra.mxu0 0.0
    %1857 = vmatprep.subr.mxu0 0.0
    %1858 = vmatpush1.msra.mxu0 0.0
    %1859 = vmatprep.subr.mxu0 0.0
    %1860 = vmatpush1.msra.mxu0 0.0
    %1861 = vmatprep.subr.mxu0 0.0
    %1862 = vmatpush1.msra.mxu0 0.0
    %1863 = vmatprep.subr.mxu0 0.0
    %1864 = vmatpush1.msra.mxu0 0.0
    %1865 = vmatprep.subr.mxu0 0.0
    %1866 = vmatpush1.msra.mxu0 0.0
    %1867 = vmatprep.subr.mxu0 0.0
    %1868 = vmatpush1.msra.mxu0 0.0
    %1869 = vmatprep.subr.mxu0 0.0
    %1870 = vmatpush1.msra.mxu0 0.0
    %1871 = vmatprep.subr.mxu0 0.0
    %1872 = vmatpush1.msra.mxu0 %v69
    %1873 = vmatprep.subr.mxu0 0.0
    %1874 = vmatpush1.msra.mxu0 %v68
    %1875 = vmatprep.subr.mxu0 0.0
    %1876 = vmatpush1.msra.mxu0 %v67
    %1877 = vmatprep.subr.mxu0 0.0
    %1878 = vmatpush1.msra.mxu0 %v66
    %1879 = vmatprep.subr.mxu0 0.0
    %1880 = vmatpush2.msra.mxu0 0.0
    %1881 = vmatprep.subr.mxu0 0.0
    %1882 = vmatpush2.msra.mxu0 0.0
    %1883 = vmatprep.subr.mxu0 0.0
    %1884 = vmatpush2.msra.mxu0 0.0
    %1885 = vmatprep.subr.mxu0 0.0
    %1886 = vmatpush2.msra.mxu0 0.0
    %1887 = vmatprep.subr.mxu0 0.0
    %1888 = vmatpush2.msra.mxu0 0.0
    %1889 = vmatprep.subr.mxu0 0.0
    %1890 = vmatpush2.msra.mxu0 0.0
    %1891 = vmatprep.subr.mxu0 0.0
    %1892 = vmatpush2.msra.mxu0 0.0
    %1893 = vmatprep.subr.mxu0 0.0
    %1894 = vmatpush2.msra.mxu0 0.0
    %1895 = vmatprep.subr.mxu0 0.0
    %1896 = vmatpush2.msra.mxu0 0.0
    %1897 = vmatprep.subr.mxu0 0.0
    %1898 = vmatpush2.msra.mxu0 0.0
    %1899 = vmatprep.subr.mxu0 0.0
    %1900 = vmatpush2.msra.mxu0 0.0
    %1901 = vmatprep.subr.mxu0 0.0
    %1902 = vmatpush2.msra.mxu0 0.0
    %1903 = vmatprep.subr.mxu0 0.0
    %1904 = vmatpush2.msra.mxu0 0.0
    %1905 = vmatprep.subr.mxu0 0.0
    %1906 = vmatpush2.msra.mxu0 0.0
    %1907 = vmatprep.subr.mxu0 0.0
    %1908 = vmatpush2.msra.mxu0 0.0
    %1909 = vmatprep.subr.mxu0 0.0
    %1910 = vmatpush2.msra.mxu0 0.0
    %1911 = vmatprep.mubr.f32.mxu0 0.0
    %1912 = vmatmul.mubr.f32.gmra.mxu0 %v1845
    %v1913 = vpop.f32.mrf.mxu0
    %v1914 = vadd.f32 %v802, %v1913
    %v1915 = vpop.f32.mrf.mxu0
    %1916 = vdwg.mxu0
    %s1917 = scalar_lea.vmem [#allocation10], 12
    %1918 = vst.msk [vmem:[%s1917] sm:$0x3] %vm879, %v1914
    %v1919 = vld [vmem:[%s690] sm:$0x3]
    %1920 = vmatprep.subr.mxu0 0.0
    %1921 = vmatpush1.msra.mxu0 0.0
    %1922 = vmatprep.subr.mxu0 0.0
    %1923 = vmatpush1.msra.mxu0 0.0
    %1924 = vmatprep.subr.mxu0 0.0
    %1925 = vmatpush1.msra.mxu0 0.0
    %1926 = vmatprep.subr.mxu0 0.0
    %1927 = vmatpush1.msra.mxu0 0.0
    %1928 = vmatprep.subr.mxu0 0.0
    %1929 = vmatpush1.msra.mxu0 0.0
    %1930 = vmatprep.subr.mxu0 0.0
    %1931 = vmatpush1.msra.mxu0 0.0
    %1932 = vmatprep.subr.mxu0 0.0
    %1933 = vmatpush1.msra.mxu0 0.0
    %1934 = vmatprep.subr.mxu0 0.0
    %1935 = vmatpush1.msra.mxu0 0.0
    %1936 = vmatprep.subr.mxu0 0.0
    %1937 = vmatpush1.msra.mxu0 0.0
    %1938 = vmatprep.subr.mxu0 0.0
    %1939 = vmatpush1.msra.mxu0 0.0
    %1940 = vmatprep.subr.mxu0 0.0
    %1941 = vmatpush1.msra.mxu0 0.0
    %1942 = vmatprep.subr.mxu0 0.0
    %1943 = vmatpush1.msra.mxu0 0.0
    %1944 = vmatprep.subr.mxu0 0.0
    %1945 = vmatpush1.msra.mxu0 %v64
    %1946 = vmatprep.subr.mxu0 0.0
    %1947 = vmatpush1.msra.mxu0 %v63
    %1948 = vmatprep.subr.mxu0 0.0
    %1949 = vmatpush1.msra.mxu0 %v62
    %1950 = vmatprep.subr.mxu0 0.0
    %1951 = vmatpush1.msra.mxu0 %v61
    %1952 = vmatprep.subr.mxu0 0.0
    %1953 = vmatpush2.msra.mxu0 0.0
    %1954 = vmatprep.subr.mxu0 0.0
    %1955 = vmatpush2.msra.mxu0 0.0
    %1956 = vmatprep.subr.mxu0 0.0
    %1957 = vmatpush2.msra.mxu0 0.0
    %1958 = vmatprep.subr.mxu0 0.0
    %1959 = vmatpush2.msra.mxu0 0.0
    %1960 = vmatprep.subr.mxu0 0.0
    %1961 = vmatpush2.msra.mxu0 0.0
    %1962 = vmatprep.subr.mxu0 0.0
    %1963 = vmatpush2.msra.mxu0 0.0
    %1964 = vmatprep.subr.mxu0 0.0
    %1965 = vmatpush2.msra.mxu0 0.0
    %1966 = vmatprep.subr.mxu0 0.0
    %1967 = vmatpush2.msra.mxu0 0.0
    %1968 = vmatprep.subr.mxu0 0.0
    %1969 = vmatpush2.msra.mxu0 0.0
    %1970 = vmatprep.subr.mxu0 0.0
    %1971 = vmatpush2.msra.mxu0 0.0
    %1972 = vmatprep.subr.mxu0 0.0
    %1973 = vmatpush2.msra.mxu0 0.0
    %1974 = vmatprep.subr.mxu0 0.0
    %1975 = vmatpush2.msra.mxu0 0.0
    %1976 = vmatprep.subr.mxu0 0.0
    %1977 = vmatpush2.msra.mxu0 0.0
    %1978 = vmatprep.subr.mxu0 0.0
    %1979 = vmatpush2.msra.mxu0 0.0
    %1980 = vmatprep.subr.mxu0 0.0
    %1981 = vmatpush2.msra.mxu0 0.0
    %1982 = vmatprep.subr.mxu0 0.0
    %1983 = vmatpush2.msra.mxu0 0.0
    %1984 = vmatprep.mubr.f32.mxu0 0.0
    %1985 = vmatmul.mubr.f32.gmra.mxu0 %v1845
    %v1986 = vpop.f32.mrf.mxu0
    %v1987 = vadd.f32 0.0, %v1986
    %v1988 = vpop.f32.mrf.mxu0
    %1989 = vdwg.mxu0
    %v1990 = vadd.f32 %v1919, %v1987
    %v1991 = vxor.u32 %v1990, 2147483648
    %v1992 = vmul.f32 %v1991, 1.442695
    %v1993 = vpow.pop %v1992
    %v1994 = vadd.f32 %v1993, 1.0
    %v1995 = vrcp.pop %v1994
    %v1996 = vmul.f32 1.0, %v1995
    %v1997 = vtanh.pop %v1990
    %v1998 = vmul.f32 %v1996, %v1835
    %2000 = vrot.lane.b32.xlu0 %v1997, 64
    %v2001 = vpop.permute.xlu0 %2000
    %v2003 = vmul.f32 %v1996, %v2001
    %2005 = vrot.lane.b32.xlu0 %v2003, 32
    %v2006 = vpop.permute.xlu0 %2005
    %v2008 = vadd.f32 %v1998, %v2006
    %v2009 = vtanh.pop %v2008
    %2011 = vrot.lane.b32.xlu0 %v2009, 64
    %v2012 = vpop.permute.xlu0 %2011
    %v2014 = vmul.f32 %v1996, %v2012
    %2016 = vrot.lane.b32.xlu0 %v2014, 32
    %v2017 = vpop.permute.xlu0 %2016
    %v2018 = vsel %vm695, %v2017, 0
    %2020 = vmatprep.subr.mxu0 0.0
    %2021 = vmatpush1.msra.mxu0 0.0
    %2022 = vmatprep.subr.mxu0 0.0
    %2023 = vmatpush1.msra.mxu0 0.0
    %2024 = vmatprep.subr.mxu0 0.0
    %2025 = vmatpush1.msra.mxu0 0.0
    %2026 = vmatprep.subr.mxu0 0.0
    %2027 = vmatpush1.msra.mxu0 0.0
    %2028 = vmatprep.subr.mxu0 0.0
    %2029 = vmatpush1.msra.mxu0 0.0
    %2030 = vmatprep.subr.mxu0 0.0
    %2031 = vmatpush1.msra.mxu0 0.0
    %2032 = vmatprep.subr.mxu0 0.0
    %2033 = vmatpush1.msra.mxu0 0.0
    %2034 = vmatprep.subr.mxu0 0.0
    %2035 = vmatpush1.msra.mxu0 0.0
    %2036 = vmatprep.subr.mxu0 0.0
    %2037 = vmatpush1.msra.mxu0 0.0
    %2038 = vmatprep.subr.mxu0 0.0
    %2039 = vmatpush1.msra.mxu0 0.0
    %2040 = vmatprep.subr.mxu0 0.0
    %2041 = vmatpush1.msra.mxu0 0.0
    %2042 = vmatprep.subr.mxu0 0.0
    %2043 = vmatpush1.msra.mxu0 0.0
    %2044 = vmatprep.subr.mxu0 0.0
    %2045 = vmatpush1.msra.mxu0 %v69
    %2046 = vmatprep.subr.mxu0 0.0
    %2047 = vmatpush1.msra.mxu0 %v68
    %2048 = vmatprep.subr.mxu0 0.0
    %2049 = vmatpush1.msra.mxu0 %v67
    %2050 = vmatprep.subr.mxu0 0.0
    %2051 = vmatpush1.msra.mxu0 %v66
    %2052 = vmatprep.subr.mxu0 0.0
    %2053 = vmatpush2.msra.mxu0 0.0
    %2054 = vmatprep.subr.mxu0 0.0
    %2055 = vmatpush2.msra.mxu0 0.0
    %2056 = vmatprep.subr.mxu0 0.0
    %2057 = vmatpush2.msra.mxu0 0.0
    %2058 = vmatprep.subr.mxu0 0.0
    %2059 = vmatpush2.msra.mxu0 0.0
    %2060 = vmatprep.subr.mxu0 0.0
    %2061 = vmatpush2.msra.mxu0 0.0
    %2062 = vmatprep.subr.mxu0 0.0
    %2063 = vmatpush2.msra.mxu0 0.0
    %2064 = vmatprep.subr.mxu0 0.0
    %2065 = vmatpush2.msra.mxu0 0.0
    %2066 = vmatprep.subr.mxu0 0.0
    %2067 = vmatpush2.msra.mxu0 0.0
    %2068 = vmatprep.subr.mxu0 0.0
    %2069 = vmatpush2.msra.mxu0 0.0
    %2070 = vmatprep.subr.mxu0 0.0
    %2071 = vmatpush2.msra.mxu0 0.0
    %2072 = vmatprep.subr.mxu0 0.0
    %2073 = vmatpush2.msra.mxu0 0.0
    %2074 = vmatprep.subr.mxu0 0.0
    %2075 = vmatpush2.msra.mxu0 0.0
    %2076 = vmatprep.subr.mxu0 0.0
    %2077 = vmatpush2.msra.mxu0 0.0
    %2078 = vmatprep.subr.mxu0 0.0
    %2079 = vmatpush2.msra.mxu0 0.0
    %2080 = vmatprep.subr.mxu0 0.0
    %2081 = vmatpush2.msra.mxu0 0.0
    %2082 = vmatprep.subr.mxu0 0.0
    %2083 = vmatpush2.msra.mxu0 0.0
    %2084 = vmatprep.mubr.f32.mxu0 0.0
    %2085 = vmatmul.mubr.f32.gmra.mxu0 %v2018
    %v2086 = vpop.f32.mrf.mxu0
    %v2087 = vadd.f32 %v802, %v2086
    %v2088 = vpop.f32.mrf.mxu0
    %2089 = vdwg.mxu0
    %s2090 = scalar_lea.vmem [#allocation10], 14
    %2091 = vst.msk [vmem:[%s2090] sm:$0x3] %vm879, %v2087
    %vm2093 = vcmask 254976
    %2094 = vst.msk [vmem:[#allocation2] sm:$0x3] %vm2093, %v2017
    %2096 = vrot.lane.b32.xlu0 %v2008, 96
    %v2097 = vpop.permute.xlu0 %2096
    %2099 = vst.msk [vmem:[#allocation3] sm:$0x3] %vm2093, %v2097
    // Predicated region
    $region38: #{tpu_custom_call.1} parent=1 // pred_check
      _
    $region39: #{tpu_custom_call.1} parent=1 // pred_check_branch
      %2101 = sbr.rel (0) target = $region41
    $region40: #{tpu_custom_call.1} parent=1 // pred_region
      %s2103 = ssub.s32 256, 256
      %2104 = vsyncadd [#allocation7], %s2103
      %s2105 = sshll.u32 [#allocation10], 4
      %s2106 = int_to_ptr.vmem [resolvable:$true] %s2105
      %2111 = dma.vmem_to_hbm [thread:$0]  %s2106, 256, %s6, [#allocation7], 32, 32, 2
    $region41: #{tpu_custom_call.1} parent=1 // pred_fallthru
      _
    // Predicated region
    $region42: #{tpu_custom_call.1} parent=1 // pred_check
      _
    $region43: #{tpu_custom_call.1} parent=1 // pred_check_branch
      %2113 = sbr.rel (0) target = $region45
    $region44: #{tpu_custom_call.1} parent=1 // pred_region
      %2114 = dma.done [#allocation7], 256
    $region45: #{tpu_custom_call.1} parent=1 // pred_fallthru
      _
    %2115 = vsyncpa [#allocation6], 1
    %2116 = vsyncpa [#allocation9], 1
    %2117 = vsyncpa [#allocation7], 1

</llo_original>
